<compile_context>
chip_gen: v7x
topology: tpu7x:2x2x1
jax: 0.10.0
libtpu: 0.0.40
codegen_flags: <defaults>
</compile_context>

<pallas_src>
import functools

import jax
import jax.numpy as jnp
from jax.experimental import pallas as pl
from jax.experimental.pallas import tpu as pltpu


def _bottleneck_kernel(x_ref, w1_ref, b1_ref, w2_ref, b2_ref, o_ref, pad_ref, *, add):
    # x_ref : (1, H, W, C1)    w1_ref: (C1, Cm) bf16      b1_ref: (1, Cm) f32
    # w2_ref: (3, 3*Cm, C2) bf16 (row-tap grouped)        b2_ref: (1, C2) f32
    # o_ref : (1, H, W, C2)    pad_ref: (H+2, W+2, Cm) bf16 scratch (zero-halo cv1 act.)
    _, H, W, C1 = x_ref.shape
    Cm = w1_ref.shape[1]
    C2 = w2_ref.shape[2]

    # ---- cv1: 1x1 conv == channel matmul (bf16 operands, f32 accumulate) ----
    xb = x_ref[0].reshape(H * W, C1).astype(jnp.bfloat16)
    h = jnp.dot(xb, w1_ref[...], preferred_element_type=jnp.float32)
    h = h + b1_ref[...]                       # BN scale folded into w1; bias only
    h = h * jax.nn.sigmoid(h)                 # SiLU

    # ---- padded cv1 activation: zero ONLY the halo border, overwrite interior ----
    zr = jnp.zeros((1, W + 2, Cm), pad_ref.dtype)
    zc = jnp.zeros((H, 1, Cm), pad_ref.dtype)
    pad_ref[0:1, :, :] = zr
    pad_ref[H + 1:H + 2, :, :] = zr
    pad_ref[1:H + 1, 0:1, :] = zc
    pad_ref[1:H + 1, W + 1:W + 2, :] = zc
    pad_ref[1:H + 1, 1:W + 1, :] = h.reshape(H, W, Cm).astype(pad_ref.dtype)

    # ---- width im2col: one lane-axis concat of the 3 column-shifted windows ----
    col = jnp.concatenate(
        [pad_ref[:, 0:W, :], pad_ref[:, 1:W + 1, :], pad_ref[:, 2:W + 2, :]],
        axis=-1)                              # (H+2, W, 3*Cm), bf16

    # ---- cv2: 3x3 conv as 3 fat MXU matmuls (K = 3*Cm), grouped by row tap ----
    # Row-tap windows are free first-axis slices of `col`.
    acc = jnp.dot(col[0:H].reshape(H * W, 3 * Cm), w2_ref[0],
                  preferred_element_type=jnp.float32)
    acc = acc + jnp.dot(col[1:H + 1].reshape(H * W, 3 * Cm), w2_ref[1],
                        preferred_element_type=jnp.float32)
    acc = acc + jnp.dot(col[2:H + 2].reshape(H * W, 3 * Cm), w2_ref[2],
                        preferred_element_type=jnp.float32)
    acc = acc + b2_ref[...]
    acc = acc * jax.nn.sigmoid(acc)           # SiLU

    if add:                                   # residual: re-read x (VMEM-resident block)
        acc = acc + x_ref[0].reshape(H * W, C1).astype(jnp.float32)
    o_ref[0] = acc.reshape(H, W, C2).astype(o_ref.dtype)


def _fold_bn(gamma, beta, mean, var, eps):
    scale = gamma / jnp.sqrt(var + eps)
    bias = beta - mean * scale
    return scale.astype(jnp.float32), bias.astype(jnp.float32)


def _vmem_limit_bytes():
    # ~96 MiB on v5e/v6e (128 MiB physical), <= 48 MiB on v7x (64 MiB physical).
    try:
        cap = int(pltpu.get_tpu_info().vmem_capacity_bytes)
        return int(min(100 * 1024 * 1024, cap * 3 // 4))
    except Exception:
        return 64 * 1024 * 1024


def bottleneck_forward(x, w1, bn1, w2, bn2, *, shortcut=True, eps=1e-5):
    """Bottleneck forward pass (inference semantics: BN running stats).

    x   : (B, C1, H, W) NCHW (PyTorch layout)
    w1  : (Cm, C1, 1, 1) cv1 conv weight
    bn1 : (gamma, beta, running_mean, running_var), each (Cm,)
    w2  : (C2, Cm, 3, 3) cv2 conv weight
    bn2 : (gamma, beta, running_mean, running_var), each (C2,)
    """
    B, C1, H, W = x.shape
    Cm = w1.shape[0]
    C2 = w2.shape[0]
    add = bool(shortcut) and (C1 == C2)

    s1, t1 = _fold_bn(*bn1, eps)
    s2, t2 = _fold_bn(*bn2, eps)

    # BN scales folded into conv weights (per output channel), bf16 for the MXU.
    w1_k = (jnp.transpose(w1.reshape(Cm, C1), (1, 0)) * s1[None, :]).astype(jnp.bfloat16)
    w2_t = jnp.transpose(w2, (2, 3, 1, 0)) * s2[None, None, None, :]   # (dh, dw, Cm, C2)
    w2_k = w2_t.reshape(3, 3 * Cm, C2).astype(jnp.bfloat16)            # K index = dw*Cm + cin

    x_nhwc = jnp.transpose(x, (0, 2, 3, 1))                            # channels on lanes

    kernel = functools.partial(_bottleneck_kernel, add=add)

    # TODO(synk): row-block spatial tiling (grid over H with a 1-row recompute halo) for
    #             feature maps too large to keep one image resident in VMEM (v7x, 64 MiB).
    # TODO(synk): lane-dense output repacking for layers with C2 < 128 (masked vst relief).
    out_nhwc = pl.pallas_call(
        kernel,
        out_shape=jax.ShapeDtypeStruct((B, H, W, C2), x.dtype),
        grid=(B,),
        in_specs=[
            pl.BlockSpec((1, H, W, C1), lambda b: (b, 0, 0, 0)),   # x (one image/step)
            pl.BlockSpec((C1, Cm), lambda b: (0, 0)),              # w1 (resident)
            pl.BlockSpec((1, Cm), lambda b: (0, 0)),               # folded BN1 bias
            pl.BlockSpec((3, 3 * Cm, C2), lambda b: (0, 0, 0)),    # w2 (resident)
            pl.BlockSpec((1, C2), lambda b: (0, 0)),               # folded BN2 bias
        ],
        out_specs=pl.BlockSpec((1, H, W, C2), lambda b: (b, 0, 0, 0)),
        scratch_shapes=[pltpu.VMEM((H + 2, W + 2, Cm), jnp.bfloat16)],
        compiler_params=pltpu.CompilerParams(
            dimension_semantics=("parallel",),       # batch split across TCs on v7x
            vmem_limit_bytes=_vmem_limit_bytes(),    # generation-aware scoped limit
        ),
    )(x_nhwc, w1_k, t1.reshape(1, Cm), w2_k, t2.reshape(1, C2))

    return jnp.transpose(out_nhwc, (0, 3, 1, 2))                      # back to NCHW


# ---------------------------------------------------------------------------
# Pure-JAX reference (same math as the PyTorch module in eval mode, f32)
# ---------------------------------------------------------------------------
def reference(x, w1, bn1, w2, bn2, *, shortcut=True, eps=1e-5):
    def conv_bn_silu(inp, w, bn, pad):
        g, b, m, v = bn
        y = jax.lax.conv_general_dilated(
            inp, w, window_strides=(1, 1),
            padding=[(pad, pad), (pad, pad)],
            dimension_numbers=("NCHW", "OIHW", "NCHW"),
            precision=jax.lax.Precision.HIGHEST)
        s = g / jnp.sqrt(v + eps)
        t = b - m * s
        y = y * s[None, :, None, None] + t[None, :, None, None]
        return y * jax.nn.sigmoid(y)

    y = conv_bn_silu(x, w1, bn1, 0)
    y = conv_bn_silu(y, w2, bn2, 1)
    add = bool(shortcut) and (x.shape[1] == w2.shape[0])
    return x + y if add else y


if __name__ == "__main__":
    # Bottleneck(c1=64, c2=64, shortcut=True, g=1, e=0.5) -> c_ = 32
    B, C1, C2, H, W = 2, 64, 64, 16, 16
    Cm = int(C2 * 0.5)

    key = jax.random.PRNGKey(0)
    keys = jax.random.split(key, 11)

    x = jax.random.normal(keys[0], (B, C1, H, W), dtype=jnp.float32)

    # Conv weights (PyTorch layout, bias=False).
    k1 = 1.0 / jnp.sqrt(jnp.float32(C1 * 1 * 1))
    k2 = 1.0 / jnp.sqrt(jnp.float32(Cm * 3 * 3))
    w1 = jax.random.uniform(keys[1], (Cm, C1, 1, 1), jnp.float32, -k1, k1)
    w2 = jax.random.uniform(keys[2], (C2, Cm, 3, 3), jnp.float32, -k2, k2)

    # BatchNorm parameters (inference: running stats).
    bn1 = (jax.random.uniform(keys[3], (Cm,), jnp.float32, 0.5, 1.5),   # gamma
           0.1 * jax.random.normal(keys[4], (Cm,), jnp.float32),        # beta
           0.1 * jax.random.normal(keys[5], (Cm,), jnp.float32),        # running_mean
           jax.random.uniform(keys[6], (Cm,), jnp.float32, 0.5, 1.5))   # running_var
    bn2 = (jax.random.uniform(keys[7], (C2,), jnp.float32, 0.5, 1.5),
           0.1 * jax.random.normal(keys[8], (C2,), jnp.float32),
           0.1 * jax.random.normal(keys[9], (C2,), jnp.float32),
           jax.random.uniform(keys[10], (C2,), jnp.float32, 0.5, 1.5))

    out = bottleneck_forward(x, w1, bn1, w2, bn2, shortcut=True)
    out = jax.block_until_ready(out)

    ref = jax.block_until_ready(reference(x, w1, bn1, w2, bn2, shortcut=True))

    assert out.shape == (B, C2, H, W), out.shape
    err = float(jnp.max(jnp.abs(out - ref)))
    # bf16 MXU operands (per perf review) -> looser tolerance than the f32 path.
    assert jnp.allclose(out, ref, atol=5e-2, rtol=5e-2), err

    print("KERNEL_OK")
</pallas_src>

<mosaic_0001>
module attributes {stable_mosaic.version = 11 : i64} {
  func.func @_bottleneck_kernel(%arg0: i32, %arg1: memref<1x16x16x64xf32, #tpu.memory_space<vmem>>, %arg2: memref<64x32xbf16, #tpu.memory_space<vmem>>, %arg3: memref<1x32xf32, #tpu.memory_space<vmem>>, %arg4: memref<3x96x64xbf16, #tpu.memory_space<vmem>>, %arg5: memref<1x64xf32, #tpu.memory_space<vmem>>, %arg6: memref<1x16x16x64xf32, #tpu.memory_space<vmem>>, %arg7: memref<18x18x32xbf16, #tpu.memory_space<vmem>>) attributes {dimension_semantics = [#tpu.dimension_semantics<parallel>], iteration_bounds = array<i64: 2>, scalar_prefetch = 0 : i64, scratch_operands = 1 : i64, tpu.core_type = #tpu.core_type<tc>, window_params = [{transform_indices = @transform_0, window_bounds = array<i64: 1, 16, 16, 64>}, {pipeline_mode = #tpu.pipeline_mode<synchronous>, transform_indices = @transform_1, window_bounds = array<i64: 64, 32>}, {pipeline_mode = #tpu.pipeline_mode<synchronous>, transform_indices = @transform_2, window_bounds = array<i64: 1, 32>}, {pipeline_mode = #tpu.pipeline_mode<synchronous>, transform_indices = @transform_3, window_bounds = array<i64: 3, 96, 64>}, {pipeline_mode = #tpu.pipeline_mode<synchronous>, transform_indices = @transform_4, window_bounds = array<i64: 1, 64>}, {transform_indices = @transform_5, window_bounds = array<i64: 1, 16, 16, 64>}]} {
    %c0 = arith.constant 0 : index
    %c0_0 = arith.constant 0 : index
    %c0_1 = arith.constant 0 : index
    %c0_2 = arith.constant 0 : index
    %0 = vector.load %arg1[%c0, %c0_0, %c0_1, %c0_2] : memref<1x16x16x64xf32, #tpu.memory_space<vmem>>, vector<1x16x16x64xf32>
    %1 = vector.shape_cast %0 : vector<1x16x16x64xf32> to vector<16x16x64xf32>
    %2 = vector.shape_cast %1 : vector<16x16x64xf32> to vector<256x64xf32>
    %3 = arith.truncf %2 : vector<256x64xf32> to vector<256x64xbf16>
    %c0_3 = arith.constant 0 : index
    %c0_4 = arith.constant 0 : index
    %4 = vector.load %arg2[%c0_3, %c0_4] : memref<64x32xbf16, #tpu.memory_space<vmem>>, vector<64x32xbf16>
    %cst = arith.constant dense<0.000000e+00> : vector<256x32xf32>
    %5 = tpu.matmul %3, %4, %cst {dimension_numbers = #tpu.dot_dimension_numbers<[1], [0], [0], [1], [0, 0, 1, 1], [], []>} : vector<256x64xbf16>, vector<64x32xbf16>, vector<256x32xf32> -> vector<256x32xf32>
    %c0_5 = arith.constant 0 : index
    %c0_6 = arith.constant 0 : index
    %6 = vector.load %arg3[%c0_5, %c0_6] : memref<1x32xf32, #tpu.memory_space<vmem>>, vector<1x32xf32>
    %7 = vector.broadcast %6 : vector<1x32xf32> to vector<256x32xf32>
    %8 = arith.addf %5, %7 : vector<256x32xf32>
    %9 = arith.negf %8 : vector<256x32xf32>
    %10 = math.exp %9 : vector<256x32xf32>
    %cst_7 = arith.constant 1.000000e+00 : f32
    %11 = vector.broadcast %cst_7 : f32 to vector<256x32xf32>
    %12 = arith.addf %11, %10 : vector<256x32xf32>
    %13 = arith.divf %11, %12 : vector<256x32xf32>
    %14 = arith.mulf %8, %13 : vector<256x32xf32>
    %cst_8 = arith.constant 0.000000e+00 : bf16
    %15 = vector.broadcast %cst_8 : bf16 to vector<1x18x32xbf16>
    %cst_9 = arith.constant 0.000000e+00 : bf16
    %16 = vector.broadcast %cst_9 : bf16 to vector<16x1x32xbf16>
    %c0_10 = arith.constant 0 : index
    %c0_11 = arith.constant 0 : index
    %c0_12 = arith.constant 0 : index
    %17 = vector.load %arg7[%c0_10, %c0_11, %c0_12] : memref<18x18x32xbf16, #tpu.memory_space<vmem>>, vector<1x18x32xbf16>
    tpu.vector_store %arg7[%c0_10, %c0_11, %c0_12], %15 {strides = array<i32>} : memref<18x18x32xbf16, #tpu.memory_space<vmem>>, vector<1x18x32xbf16>,
    %c17 = arith.constant 17 : index
    %c0_13 = arith.constant 0 : index
    %c0_14 = arith.constant 0 : index
    %18 = vector.load %arg7[%c17, %c0_13, %c0_14] : memref<18x18x32xbf16, #tpu.memory_space<vmem>>, vector<1x18x32xbf16>
    tpu.vector_store %arg7[%c17, %c0_13, %c0_14], %15 {strides = array<i32>} : memref<18x18x32xbf16, #tpu.memory_space<vmem>>, vector<1x18x32xbf16>,
    %c1 = arith.constant 1 : index
    %c0_15 = arith.constant 0 : index
    %c0_16 = arith.constant 0 : index
    %19 = vector.load %arg7[%c1, %c0_15, %c0_16] : memref<18x18x32xbf16, #tpu.memory_space<vmem>>, vector<16x1x32xbf16>
    tpu.vector_store %arg7[%c1, %c0_15, %c0_16], %16 {strides = array<i32>} : memref<18x18x32xbf16, #tpu.memory_space<vmem>>, vector<16x1x32xbf16>,
    %c1_17 = arith.constant 1 : index
    %c17_18 = arith.constant 17 : index
    %c0_19 = arith.constant 0 : index
    %20 = vector.load %arg7[%c1_17, %c17_18, %c0_19] : memref<18x18x32xbf16, #tpu.memory_space<vmem>>, vector<16x1x32xbf16>
    tpu.vector_store %arg7[%c1_17, %c17_18, %c0_19], %16 {strides = array<i32>} : memref<18x18x32xbf16, #tpu.memory_space<vmem>>, vector<16x1x32xbf16>,
    %21 = vector.shape_cast %14 : vector<256x32xf32> to vector<16x16x32xf32>
    %22 = arith.truncf %21 : vector<16x16x32xf32> to vector<16x16x32xbf16>
    %c1_20 = arith.constant 1 : index
    %c1_21 = arith.constant 1 : index
    %c0_22 = arith.constant 0 : index
    %23 = vector.load %arg7[%c1_20, %c1_21, %c0_22] : memref<18x18x32xbf16, #tpu.memory_space<vmem>>, vector<16x16x32xbf16>
    tpu.vector_store %arg7[%c1_20, %c1_21, %c0_22], %22 {strides = array<i32>} : memref<18x18x32xbf16, #tpu.memory_space<vmem>>, vector<16x16x32xbf16>,
    %c0_23 = arith.constant 0 : index
    %c0_24 = arith.constant 0 : index
    %c0_25 = arith.constant 0 : index
    %24 = vector.load %arg7[%c0_23, %c0_24, %c0_25] : memref<18x18x32xbf16, #tpu.memory_space<vmem>>, vector<18x16x32xbf16>
    %c0_26 = arith.constant 0 : index
    %c1_27 = arith.constant 1 : index
    %c0_28 = arith.constant 0 : index
    %25 = vector.load %arg7[%c0_26, %c1_27, %c0_28] : memref<18x18x32xbf16, #tpu.memory_space<vmem>>, vector<18x16x32xbf16>
    %c0_29 = arith.constant 0 : index
    %c2 = arith.constant 2 : index
    %c0_30 = arith.constant 0 : index
    %26 = vector.load %arg7[%c0_29, %c2, %c0_30] : memref<18x18x32xbf16, #tpu.memory_space<vmem>>, vector<18x16x32xbf16>
    %27 = tpu.concatenate %24, %25, %26 in 2 : vector<18x16x32xbf16>, vector<18x16x32xbf16>, vector<18x16x32xbf16> -> vector<18x16x96xbf16>
    %28 = vector.extract_strided_slice %27 {offsets = [0, 0, 0], sizes = [16, 16, 96], strides = [1, 1, 1]} : vector<18x16x96xbf16> to vector<16x16x96xbf16>
    %29 = vector.shape_cast %28 : vector<16x16x96xbf16> to vector<256x96xbf16>
    %c0_31 = arith.constant 0 : index
    %c0_32 = arith.constant 0 : index
    %c0_33 = arith.constant 0 : index
    %30 = vector.load %arg4[%c0_31, %c0_32, %c0_33] : memref<3x96x64xbf16, #tpu.memory_space<vmem>>, vector<1x96x64xbf16>
    %31 = vector.shape_cast %30 : vector<1x96x64xbf16> to vector<96x64xbf16>
    %cst_34 = arith.constant dense<0.000000e+00> : vector<256x64xf32>
    %32 = tpu.matmul %29, %31, %cst_34 {dimension_numbers = #tpu.dot_dimension_numbers<[1], [0], [0], [1], [0, 0, 1, 1], [], []>} : vector<256x96xbf16>, vector<96x64xbf16>, vector<256x64xf32> -> vector<256x64xf32>
    %33 = vector.extract_strided_slice %27 {offsets = [1, 0, 0], sizes = [16, 16, 96], strides = [1, 1, 1]} : vector<18x16x96xbf16> to vector<16x16x96xbf16>
    %34 = vector.shape_cast %33 : vector<16x16x96xbf16> to vector<256x96xbf16>
    %c1_35 = arith.constant 1 : index
    %c0_36 = arith.constant 0 : index
    %c0_37 = arith.constant 0 : index
    %35 = vector.load %arg4[%c1_35, %c0_36, %c0_37] : memref<3x96x64xbf16, #tpu.memory_space<vmem>>, vector<1x96x64xbf16>
    %36 = vector.shape_cast %35 : vector<1x96x64xbf16> to vector<96x64xbf16>
    %cst_38 = arith.constant dense<0.000000e+00> : vector<256x64xf32>
    %37 = tpu.matmul %34, %36, %cst_38 {dimension_numbers = #tpu.dot_dimension_numbers<[1], [0], [0], [1], [0, 0, 1, 1], [], []>} : vector<256x96xbf16>, vector<96x64xbf16>, vector<256x64xf32> -> vector<256x64xf32>
    %38 = arith.addf %32, %37 : vector<256x64xf32>
    %39 = vector.extract_strided_slice %27 {offsets = [2, 0, 0], sizes = [16, 16, 96], strides = [1, 1, 1]} : vector<18x16x96xbf16> to vector<16x16x96xbf16>
    %40 = vector.shape_cast %39 : vector<16x16x96xbf16> to vector<256x96xbf16>
    %c2_39 = arith.constant 2 : index
    %c0_40 = arith.constant 0 : index
    %c0_41 = arith.constant 0 : index
    %41 = vector.load %arg4[%c2_39, %c0_40, %c0_41] : memref<3x96x64xbf16, #tpu.memory_space<vmem>>, vector<1x96x64xbf16>
    %42 = vector.shape_cast %41 : vector<1x96x64xbf16> to vector<96x64xbf16>
    %cst_42 = arith.constant dense<0.000000e+00> : vector<256x64xf32>
    %43 = tpu.matmul %40, %42, %cst_42 {dimension_numbers = #tpu.dot_dimension_numbers<[1], [0], [0], [1], [0, 0, 1, 1], [], []>} : vector<256x96xbf16>, vector<96x64xbf16>, vector<256x64xf32> -> vector<256x64xf32>
    %44 = arith.addf %38, %43 : vector<256x64xf32>
    %c0_43 = arith.constant 0 : index
    %c0_44 = arith.constant 0 : index
    %45 = vector.load %arg5[%c0_43, %c0_44] : memref<1x64xf32, #tpu.memory_space<vmem>>, vector<1x64xf32>
    %46 = vector.broadcast %45 : vector<1x64xf32> to vector<256x64xf32>
    %47 = arith.addf %44, %46 : vector<256x64xf32>
    %48 = arith.negf %47 : vector<256x64xf32>
    %49 = math.exp %48 : vector<256x64xf32>
    %cst_45 = arith.constant 1.000000e+00 : f32
    %50 = vector.broadcast %cst_45 : f32 to vector<256x64xf32>
    %51 = arith.addf %50, %49 : vector<256x64xf32>
    %52 = arith.divf %50, %51 : vector<256x64xf32>
    %53 = arith.mulf %47, %52 : vector<256x64xf32>
    %c0_46 = arith.constant 0 : index
    %c0_47 = arith.constant 0 : index
    %c0_48 = arith.constant 0 : index
    %c0_49 = arith.constant 0 : index
    %54 = vector.load %arg1[%c0_46, %c0_47, %c0_48, %c0_49] : memref<1x16x16x64xf32, #tpu.memory_space<vmem>>, vector<1x16x16x64xf32>
    %55 = vector.shape_cast %54 : vector<1x16x16x64xf32> to vector<16x16x64xf32>
    %56 = vector.shape_cast %55 : vector<16x16x64xf32> to vector<256x64xf32>
    %57 = arith.addf %53, %56 : vector<256x64xf32>
    %58 = vector.shape_cast %57 : vector<256x64xf32> to vector<16x16x64xf32>
    %c0_50 = arith.constant 0 : index
    %c0_51 = arith.constant 0 : index
    %c0_52 = arith.constant 0 : index
    %c0_53 = arith.constant 0 : index
    %59 = vector.load %arg6[%c0_50, %c0_51, %c0_52, %c0_53] : memref<1x16x16x64xf32, #tpu.memory_space<vmem>>, vector<1x16x16x64xf32>
    %60 = vector.shape_cast %59 : vector<1x16x16x64xf32> to vector<16x16x64xf32>
    %61 = vector.shape_cast %58 : vector<16x16x64xf32> to vector<1x16x16x64xf32>
    tpu.vector_store %arg6[%c0_50, %c0_51, %c0_52, %c0_53], %61 {strides = array<i32>} : memref<1x16x16x64xf32, #tpu.memory_space<vmem>>, vector<1x16x16x64xf32>,
    return
  }
  func.func @transform_0(%arg0: i32) -> (i32, i32, i32, i32) {
    %c0_i32 = arith.constant 0 : i32
    %c0_i32_0 = arith.constant 0 : i32
    %c0_i32_1 = arith.constant 0 : i32
    %c0_i32_2 = arith.constant 0 : i32
    return %arg0, %c0_i32, %c0_i32_0, %c0_i32_1 : i32, i32, i32, i32
  }
  func.func @transform_1(%arg0: i32) -> (i32, i32) {
    %c0_i32 = arith.constant 0 : i32
    %c0_i32_0 = arith.constant 0 : i32
    %c0_i32_1 = arith.constant 0 : i32
    return %c0_i32, %c0_i32_0 : i32, i32
  }
  func.func @transform_2(%arg0: i32) -> (i32, i32) {
    %c0_i32 = arith.constant 0 : i32
    %c0_i32_0 = arith.constant 0 : i32
    %c0_i32_1 = arith.constant 0 : i32
    return %c0_i32, %c0_i32_0 : i32, i32
  }
  func.func @transform_3(%arg0: i32) -> (i32, i32, i32) {
    %c0_i32 = arith.constant 0 : i32
    %c0_i32_0 = arith.constant 0 : i32
    %c0_i32_1 = arith.constant 0 : i32
    %c0_i32_2 = arith.constant 0 : i32
    return %c0_i32, %c0_i32_0, %c0_i32_1 : i32, i32, i32
  }
  func.func @transform_4(%arg0: i32) -> (i32, i32) {
    %c0_i32 = arith.constant 0 : i32
    %c0_i32_0 = arith.constant 0 : i32
    %c0_i32_1 = arith.constant 0 : i32
    return %c0_i32, %c0_i32_0 : i32, i32
  }
  func.func @transform_5(%arg0: i32) -> (i32, i32, i32, i32) {
    %c0_i32 = arith.constant 0 : i32
    %c0_i32_0 = arith.constant 0 : i32
    %c0_i32_1 = arith.constant 0 : i32
    %c0_i32_2 = arith.constant 0 : i32
    return %arg0, %c0_i32, %c0_i32_0, %c0_i32_1 : i32, i32, i32, i32
  }
}

</mosaic_0001>

<llo_original>
// kernel: tpu_custom_call.1
$region0: #{tpu_custom_call.1}
  #allocation0 [shape = 'u32[]', space=smem, size = 0x4, offset = 0x4, fixed_abs, tag = 'smem constant byte address 0x4 - core index']
  #allocation1 [shape = 'u32[144,128]{1,0:T(1,128)}', space=vmem, size = 0x12000, scoped, tag = 'internal scratch']
  #allocation2 [shape = 'bf16[18,18,32]{2,1,0:T(8,128)(2,1)}', space=vmem, size = 0x1b000, scoped, tag = 'scratch operand']
  %s0 = inlined_call_operand.hbm [shape: f32[2,16,16,64], index: 0, kind: input, shape index: {}]
  %s1 = inlined_call_operand.hbm [shape: bf16[64,32], index: 1, kind: input, shape index: {}]
  %s2 = inlined_call_operand.hbm [shape: f32[1,32], index: 2, kind: input, shape index: {}]
  %s3 = inlined_call_operand.hbm [shape: bf16[3,96,64], index: 3, kind: input, shape index: {}]
  %s4 = inlined_call_operand.hbm [shape: f32[1,64], index: 4, kind: input, shape index: {}]
  %s5 = inlined_call_operand.hbm [shape: f32[2,16,16,64], index: 5, kind: output, shape index: {}]
  %s6 = sld [smem:[#allocation0]]
  $region73: #{tpu_custom_call.1} parent=0
    _
  %s8 = ssub.s32 1, %s6
  %s9 = scalar_select 0, %s8, %s6
  $region1: #{tpu_custom_call.1} parent=0
    #allocation3 [shape = 'u8[262144]{0}', space=vmem, size = 0x40000, scoped, tag = 'input window, operand 0']
    #allocation4 [shape = 's32[2]{0}', space=sflag, size = 0x8, scoped, tag = 'scoped memory for tpu_custom_call.1']
    #allocation5 [shape = 's32[2]{0}', space=sflag, size = 0x8, scoped, tag = 'scoped memory for tpu_custom_call.1']
    #allocation6 [shape = 'u8[16384]{0}', space=vmem, size = 0x4000, scoped, tag = 'input window, operand 1, single buffered']
    #allocation7 [shape = 's32[1]{0}', space=sflag, size = 0x4, scoped, tag = 'scoped memory for tpu_custom_call.1']
    #allocation8 [shape = 'u8[512]{0}', space=vmem, size = 0x400, scoped, tag = 'input window, operand 2, single buffered']
    #allocation9 [shape = 'u8[73728]{0}', space=vmem, size = 0x12000, scoped, tag = 'input window, operand 3, single buffered']
    #allocation10 [shape = 's32[1]{0}', space=sflag, size = 0x4, scoped, tag = 'scoped memory for tpu_custom_call.1']
    #allocation11 [shape = 'u8[512]{0}', space=vmem, size = 0x400, scoped, tag = 'input window, operand 4, single buffered']
    #allocation12 [shape = 'u8[262144]{0}', space=vmem, size = 0x40000, scoped, tag = 'output window, operand 0']
    %10 = vsyncpa [#allocation4], 0
    %s11 = scalar_lea.sflag [#allocation4], 1
    %12 = vsyncpa %s11, 0
    %13 = vsyncpa [#allocation7], 0
    %14 = vsyncpa [#allocation10], 0
    %15 = vsyncpa [#allocation5], 0
    %s16 = scalar_lea.sflag [#allocation5], 1
    %17 = vsyncpa %s16, 0
    loop: start=0, step=1, limit=4
    $region2: #{tpu_custom_call.1} parent=1 // loop_pre_header
      _
    $region3: #{tpu_custom_call.1} parent=1 // loop_header
      %s19 = sphi 0, %s23
      %p20 = scmp.ge.s32.totalorder %s19, 4
      %s29 = sphi 0, %s31
      %s32 = sphi 0, %s29
      %s33 = sphi 0, %s32
      %s49 = sphi 0, %s33
      %s53 = sphi 0, %s53
      %s55 = sphi 0, %s53
      %s56 = sphi 0, %s55
      %s70 = sphi 0, %s56
      %s74 = sphi 0, %s74
      %s76 = sphi 0, %s74
      %s77 = sphi 0, %s76
      %s91 = sphi 0, %s77
      %s95 = sphi 0, %s95
      %s97 = sphi 0, %s95
      %s98 = sphi 0, %s97
      %s112 = sphi 0, %s98
      %s116 = sphi 0, %s116
      %s118 = sphi 0, %s116
      %s119 = sphi 0, %s118
      %s133 = sphi 0, %s119
      %s139 = sphi 0, %s141
      %s142 = sphi 0, %s139
      %s143 = sphi 0, %s142
      %s159 = sphi 0, %s143
    $region4: #{tpu_custom_call.1} parent=1 // loop_header_branch
      %22 = sbr.rel (%p20) target = $region8
    $region5: #{tpu_custom_call.1} parent=1 // loop_body
      %s24 = ssub.s32 %s19, 1
      %s25 = ssub.s32 %s19, 2
      %s26 = sadd.s32 %s19, 1
      %s27 = ssub.s32 %s19, %s26
      %p28 = scmp.eq.s32.totalorder %s27, 0
      %s30 = sadd.s32 %s29, 1
      %s31 = scalar_select %p28, %s29, %s30
      %p34 = pneg %p28
      %p35 = scmp.eq.s32.totalorder %s19, 1
      %p36 = por %p34, %p35
      %p37 = scmp.ne.s32.totalorder %s29, %s32
      %p38 = scmp.eq.s32.totalorder %s19, 0
      %p39 = por %p37, %p38
      %p40 = scmp.ne.s32.totalorder %s29, %s32
      %p41 = scmp.eq.s32.totalorder %s24, 1
      %p42 = por %p40, %p41
      %p43 = scmp.ne.s32.totalorder %s32, %s33
      %p44 = scmp.eq.s32.totalorder %s24, 0
      %p45 = por %p43, %p44
      %p46 = scmp.ne.s32.totalorder %s32, %s33
      %p47 = scmp.eq.s32.totalorder %s25, 1
      %p48 = por %p46, %p47
      %p50 = scmp.ne.s32.totalorder %s33, %s49
      %p51 = scmp.eq.s32.totalorder %s25, 0
      %p52 = por %p50, %p51
      %s54 = sadd.s32 %s53, 1
      %p57 = scmp.eq.s32.totalorder %s19, 1
      %p58 = scmp.ne.s32.totalorder %s53, %s55
      %p59 = scmp.eq.s32.totalorder %s19, 0
      %p60 = por %p58, %p59
      %p61 = scmp.ne.s32.totalorder %s53, %s55
      %p62 = scmp.eq.s32.totalorder %s24, 1
      %p63 = por %p61, %p62
      %p64 = scmp.ne.s32.totalorder %s55, %s56
      %p65 = scmp.eq.s32.totalorder %s24, 0
      %p66 = por %p64, %p65
      %p67 = scmp.ne.s32.totalorder %s55, %s56
      %p68 = scmp.eq.s32.totalorder %s25, 1
      %p69 = por %p67, %p68
      %p71 = scmp.ne.s32.totalorder %s56, %s70
      %p72 = scmp.eq.s32.totalorder %s25, 0
      %p73 = por %p71, %p72
      %s75 = sadd.s32 %s74, 1
      %p78 = scmp.eq.s32.totalorder %s19, 1
      %p79 = scmp.ne.s32.totalorder %s74, %s76
      %p80 = scmp.eq.s32.totalorder %s19, 0
      %p81 = por %p79, %p80
      %p82 = scmp.ne.s32.totalorder %s74, %s76
      %p83 = scmp.eq.s32.totalorder %s24, 1
      %p84 = por %p82, %p83
      %p85 = scmp.ne.s32.totalorder %s76, %s77
      %p86 = scmp.eq.s32.totalorder %s24, 0
      %p87 = por %p85, %p86
      %p88 = scmp.ne.s32.totalorder %s76, %s77
      %p89 = scmp.eq.s32.totalorder %s25, 1
      %p90 = por %p88, %p89
      %p92 = scmp.ne.s32.totalorder %s77, %s91
      %p93 = scmp.eq.s32.totalorder %s25, 0
      %p94 = por %p92, %p93
      %s96 = sadd.s32 %s95, 1
      %p99 = scmp.eq.s32.totalorder %s19, 1
      %p100 = scmp.ne.s32.totalorder %s95, %s97
      %p101 = scmp.eq.s32.totalorder %s19, 0
      %p102 = por %p100, %p101
      %p103 = scmp.ne.s32.totalorder %s95, %s97
      %p104 = scmp.eq.s32.totalorder %s24, 1
      %p105 = por %p103, %p104
      %p106 = scmp.ne.s32.totalorder %s97, %s98
      %p107 = scmp.eq.s32.totalorder %s24, 0
      %p108 = por %p106, %p107
      %p109 = scmp.ne.s32.totalorder %s97, %s98
      %p110 = scmp.eq.s32.totalorder %s25, 1
      %p111 = por %p109, %p110
      %p113 = scmp.ne.s32.totalorder %s98, %s112
      %p114 = scmp.eq.s32.totalorder %s25, 0
      %p115 = por %p113, %p114
      %s117 = sadd.s32 %s116, 1
      %p120 = scmp.eq.s32.totalorder %s19, 1
      %p121 = scmp.ne.s32.totalorder %s116, %s118
      %p122 = scmp.eq.s32.totalorder %s19, 0
      %p123 = por %p121, %p122
      %p124 = scmp.ne.s32.totalorder %s116, %s118
      %p125 = scmp.eq.s32.totalorder %s24, 1
      %p126 = por %p124, %p125
      %p127 = scmp.ne.s32.totalorder %s118, %s119
      %p128 = scmp.eq.s32.totalorder %s24, 0
      %p129 = por %p127, %p128
      %p130 = scmp.ne.s32.totalorder %s118, %s119
      %p131 = scmp.eq.s32.totalorder %s25, 1
      %p132 = por %p130, %p131
      %p134 = scmp.ne.s32.totalorder %s119, %s133
      %p135 = scmp.eq.s32.totalorder %s25, 0
      %p136 = por %p134, %p135
      %s137 = ssub.s32 %s19, %s26
      %p138 = scmp.eq.s32.totalorder %s137, 0
      %s140 = sadd.s32 %s139, 1
      %s141 = scalar_select %p138, %s139, %s140
      %p144 = pneg %p138
      %p145 = scmp.eq.s32.totalorder %s19, 1
      %p146 = por %p144, %p145
      %p147 = scmp.ne.s32.totalorder %s139, %s142
      %p148 = scmp.eq.s32.totalorder %s19, 0
      %p149 = por %p147, %p148
      %p150 = scmp.ne.s32.totalorder %s139, %s142
      %p151 = scmp.eq.s32.totalorder %s24, 1
      %p152 = por %p150, %p151
      %p153 = scmp.ne.s32.totalorder %s142, %s143
      %p154 = scmp.eq.s32.totalorder %s24, 0
      %p155 = por %p153, %p154
      %p156 = scmp.ne.s32.totalorder %s142, %s143
      %p157 = scmp.eq.s32.totalorder %s25, 1
      %p158 = por %p156, %p157
      %p160 = scmp.ne.s32.totalorder %s143, %s159
      %p161 = scmp.eq.s32.totalorder %s25, 0
      %p162 = por %p160, %p161
      %p163 = scmp.le.s32.totalorder 1, %s19
      %p164 = scmp.lt.s32.totalorder %s19, 3
      %p165 = pnand %p163, %p164
      %p166 = pneg %p165
      // Predicated region
      $region9: #{tpu_custom_call.1} parent=5 // pred_check
        _
      $region10: #{tpu_custom_call.1} parent=5 // pred_check_branch
        %168 = sbr.rel (%p165) target = $region12
      $region11: #{tpu_custom_call.1} parent=5 // pred_region
        %s169 = ssub.s32 %s19, 1
        // Predicated region
        $region13: #{tpu_custom_call.1} parent=11 // pred_check
          %p170 = pneg %p66
        $region14: #{tpu_custom_call.1} parent=11 // pred_check_branch
          %172 = sbr.rel (%p170) target = $region16
        $region15: #{tpu_custom_call.1} parent=11 // pred_region
          %s174 = ssub.s32 512, 512
          %175 = vsyncadd [#allocation7], %s174
          %s176 = sshll.u32 [#allocation6], 4
          %s177 = int_to_ptr.vmem [resolvable:$true] %s176
          %182 = dma.hbm_to_vmem [thread:$0]  %s1, 512, %s177, [#allocation7], 64, 64, 4
        $region16: #{tpu_custom_call.1} parent=11 // pred_fallthru
          _
        // Predicated region
        $region17: #{tpu_custom_call.1} parent=11 // pred_check
          %p183 = pneg %p87
        $region18: #{tpu_custom_call.1} parent=11 // pred_check_branch
          %185 = sbr.rel (%p183) target = $region20
        $region19: #{tpu_custom_call.1} parent=11 // pred_region
          %s187 = ssub.s32 16, 16
          %188 = vsyncadd [#allocation7], %s187
          %s190 = sshll.u32 [#allocation8], 4
          %s191 = int_to_ptr.vmem [resolvable:$true] %s190
          %193 = dma.hbm_to_vmem [thread:$0]  %s2, 16, %s191, [#allocation7]
        $region20: #{tpu_custom_call.1} parent=11 // pred_fallthru
          _
        // Predicated region
        $region21: #{tpu_custom_call.1} parent=11 // pred_check
          %p194 = pneg %p108
        $region22: #{tpu_custom_call.1} parent=11 // pred_check_branch
          %196 = sbr.rel (%p194) target = $region24
        $region23: #{tpu_custom_call.1} parent=11 // pred_region
          %s198 = ssub.s32 2304, 2304
          %199 = vsyncadd [#allocation10], %s198
          %s200 = sshll.u32 [#allocation9], 4
          %s201 = int_to_ptr.vmem [resolvable:$true] %s200
          %206 = dma.hbm_to_vmem [thread:$0]  %s3, 2304, %s201, [#allocation10], 64, 64, 4
        $region24: #{tpu_custom_call.1} parent=11 // pred_fallthru
          _
        // Predicated region
        $region25: #{tpu_custom_call.1} parent=11 // pred_check
          %p207 = pneg %p129
        $region26: #{tpu_custom_call.1} parent=11 // pred_check_branch
          %209 = sbr.rel (%p207) target = $region28
        $region27: #{tpu_custom_call.1} parent=11 // pred_region
          %s211 = ssub.s32 16, 16
          %212 = vsyncadd [#allocation10], %s211
          %s214 = sshll.u32 [#allocation11], 4
          %s215 = int_to_ptr.vmem [resolvable:$true] %s214
          %217 = dma.hbm_to_vmem [thread:$0]  %s4, 16, %s215, [#allocation10]
        $region28: #{tpu_custom_call.1} parent=11 // pred_fallthru
          _
      $region12: #{tpu_custom_call.1} parent=5 // pred_fallthru
        _
      %p218 = scmp.lt.s32.totalorder %s19, 2
      // Predicated region
      $region29: #{tpu_custom_call.1} parent=5 // pred_check
        %p219 = pneg %p218
      $region30: #{tpu_custom_call.1} parent=5 // pred_check_branch
        %221 = sbr.rel (%p219) target = $region32
      $region31: #{tpu_custom_call.1} parent=5 // pred_region
        // Predicated region
        $region33: #{tpu_custom_call.1} parent=31 // pred_check
          %p222 = pneg %p39
        $region34: #{tpu_custom_call.1} parent=31 // pred_check_branch
          %224 = sbr.rel (%p222) target = $region36
        $region35: #{tpu_custom_call.1} parent=31 // pred_region
          %s225 = sand.u32 %s29, 1
          %s226 = scalar_lea.sflag [#allocation4], %s225
          %s227 = sand.u32 %s29, 1
          %s228 = smul.addr %s227, 256
          %s229 = scalar_lea.vmem [#allocation3], %s228
          %s231 = ssub.s32 4096, 4096
          %232 = vsyncadd %s226, %s231
          %s233 = smul.addr %s19, 32
          %s234 = smul.addr %s233, 128
          %s235 = scalar_lea.hbm %s0, %s234
          %s236 = sshll.u32 %s229, 4
          %s237 = int_to_ptr.vmem [resolvable:$true] %s236
          %242 = dma.hbm_to_vmem [thread:$0]  %s235, 4096, %s237, %s226, 128, 128, 8
        $region36: #{tpu_custom_call.1} parent=31 // pred_fallthru
          _
      $region32: #{tpu_custom_call.1} parent=5 // pred_fallthru
        _
      %p243 = scmp.le.s32.totalorder 1, %s19
      %p244 = scmp.lt.s32.totalorder %s19, 3
      %p245 = pnand %p243, %p244
      %p246 = pneg %p245
      // Predicated region
      $region37: #{tpu_custom_call.1} parent=5 // pred_check
        _
      $region38: #{tpu_custom_call.1} parent=5 // pred_check_branch
        %248 = sbr.rel (%p245) target = $region40
      $region39: #{tpu_custom_call.1} parent=5 // pred_region
        %s249 = ssub.s32 %s19, 1
        %s250 = sand.u32 %s32, 1
        %s251 = scalar_lea.sflag [#allocation4], %s250
        %s252 = sand.u32 %s32, 1
        %s253 = smul.addr %s252, 256
        %s254 = scalar_lea.vmem [#allocation3], %s253
        // Predicated region
        $region41: #{tpu_custom_call.1} parent=39 // pred_check
          %p255 = pneg %p45
        $region42: #{tpu_custom_call.1} parent=39 // pred_check_branch
          %257 = sbr.rel (%p255) target = $region44
        $region43: #{tpu_custom_call.1} parent=39 // pred_region
          %258 = dma.done %s251, 4096
        $region44: #{tpu_custom_call.1} parent=39 // pred_fallthru
          _
        // Predicated region
        $region45: #{tpu_custom_call.1} parent=39 // pred_check
          %p259 = pneg %p66
        $region46: #{tpu_custom_call.1} parent=39 // pred_check_branch
          %261 = sbr.rel (%p259) target = $region48
        $region47: #{tpu_custom_call.1} parent=39 // pred_region
          %262 = dma.done [#allocation7], 512
        $region48: #{tpu_custom_call.1} parent=39 // pred_fallthru
          _
        // Predicated region
        $region49: #{tpu_custom_call.1} parent=39 // pred_check
          %p263 = pneg %p87
        $region50: #{tpu_custom_call.1} parent=39 // pred_check_branch
          %265 = sbr.rel (%p263) target = $region52
        $region51: #{tpu_custom_call.1} parent=39 // pred_region
          %266 = dma.done [#allocation7], 16
        $region52: #{tpu_custom_call.1} parent=39 // pred_fallthru
          _
        // Predicated region
        $region53: #{tpu_custom_call.1} parent=39 // pred_check
          %p267 = pneg %p108
        $region54: #{tpu_custom_call.1} parent=39 // pred_check_branch
          %269 = sbr.rel (%p267) target = $region56
        $region55: #{tpu_custom_call.1} parent=39 // pred_region
          %270 = dma.done [#allocation10], 2304
        $region56: #{tpu_custom_call.1} parent=39 // pred_fallthru
          _
        // Predicated region
        $region57: #{tpu_custom_call.1} parent=39 // pred_check
          %p271 = pneg %p129
        $region58: #{tpu_custom_call.1} parent=39 // pred_check_branch
          %273 = sbr.rel (%p271) target = $region60
        $region59: #{tpu_custom_call.1} parent=39 // pred_region
          %274 = dma.done [#allocation10], 16
        $region60: #{tpu_custom_call.1} parent=39 // pred_fallthru
          _
        %s275 = sand.u32 %s32, 1
        %s276 = scalar_lea.sflag [#allocation4], %s275
        %s277 = sand.u32 %s32, 1
        %s278 = smul.addr %s277, 256
        %s279 = scalar_lea.vmem [#allocation3], %s278
        %p280 = pneg %p45
        %p281 = pneg %p42
        %p282 = pneg %p66
        %p283 = pneg %p63
        %p284 = pneg %p87
        %p285 = pneg %p84
        %p286 = pneg %p108
        %p287 = pneg %p105
        %p288 = pneg %p129
        %p289 = pneg %p126
        %p290 = pneg %p155
        %p291 = pneg %p152
        %s292 = sand.u32 %s142, 1
        %s293 = scalar_lea.sflag [#allocation5], %s292
        %s294 = sand.u32 %s142, 1
        %s295 = smul.addr %s294, 256
        %s296 = scalar_lea.vmem [#allocation12], %s295
        %v298 = vld [vmem:[%s254] sm:$0xff]
        %v299 = vld [vmem:[%s254 + $0x8] sm:$0xff]
        %v300 = vld [vmem:[%s254 + $0x10] sm:$0xff]
        %v301 = vld [vmem:[%s254 + $0x18] sm:$0xff]
        %v302 = vld [vmem:[%s254 + $0x20] sm:$0xff]
        %v303 = vld [vmem:[%s254 + $0x28] sm:$0xff]
        %v304 = vld [vmem:[%s254 + $0x30] sm:$0xff]
        %v305 = vld [vmem:[%s254 + $0x38] sm:$0xff]
        %v306 = vld [vmem:[%s254 + $0x40] sm:$0xff]
        %v307 = vld [vmem:[%s254 + $0x48] sm:$0xff]
        %v308 = vld [vmem:[%s254 + $0x50] sm:$0xff]
        %v309 = vld [vmem:[%s254 + $0x58] sm:$0xff]
        %v310 = vld [vmem:[%s254 + $0x60] sm:$0xff]
        %v311 = vld [vmem:[%s254 + $0x68] sm:$0xff]
        %v312 = vld [vmem:[%s254 + $0x70] sm:$0xff]
        %v313 = vld [vmem:[%s254 + $0x78] sm:$0xff]
        %v314 = vld [vmem:[%s254 + $0x80] sm:$0xff]
        %v315 = vld [vmem:[%s254 + $0x88] sm:$0xff]
        %v316 = vld [vmem:[%s254 + $0x90] sm:$0xff]
        %v317 = vld [vmem:[%s254 + $0x98] sm:$0xff]
        %v318 = vld [vmem:[%s254 + $0xa0] sm:$0xff]
        %v319 = vld [vmem:[%s254 + $0xa8] sm:$0xff]
        %v320 = vld [vmem:[%s254 + $0xb0] sm:$0xff]
        %v321 = vld [vmem:[%s254 + $0xb8] sm:$0xff]
        %v322 = vld [vmem:[%s254 + $0xc0] sm:$0xff]
        %v323 = vld [vmem:[%s254 + $0xc8] sm:$0xff]
        %v324 = vld [vmem:[%s254 + $0xd0] sm:$0xff]
        %v325 = vld [vmem:[%s254 + $0xd8] sm:$0xff]
        %v326 = vld [vmem:[%s254 + $0xe0] sm:$0xff]
        %v327 = vld [vmem:[%s254 + $0xe8] sm:$0xff]
        %v328 = vld [vmem:[%s254 + $0xf0] sm:$0xff]
        %v329 = vld [vmem:[%s254 + $0xf8] sm:$0xff]
        %v330 = vpack.c.bf16 %v299, %v298
        %v331 = vpack.c.bf16 %v301, %v300
        %v332 = vpack.c.bf16 %v303, %v302
        %v333 = vpack.c.bf16 %v305, %v304
        %v334 = vpack.c.bf16 %v307, %v306
        %v335 = vpack.c.bf16 %v309, %v308
        %v336 = vpack.c.bf16 %v311, %v310
        %v337 = vpack.c.bf16 %v313, %v312
        %v338 = vpack.c.bf16 %v315, %v314
        %v339 = vpack.c.bf16 %v317, %v316
        %v340 = vpack.c.bf16 %v319, %v318
        %v341 = vpack.c.bf16 %v321, %v320
        %v342 = vpack.c.bf16 %v323, %v322
        %v343 = vpack.c.bf16 %v325, %v324
        %v344 = vpack.c.bf16 %v327, %v326
        %v345 = vpack.c.bf16 %v329, %v328
        %v346 = vld [vmem:[#allocation6] sm:$0xf]
        %v347 = vld [vmem:[#allocation6 + $0x4] sm:$0xf]
        %v348 = vld [vmem:[#allocation6 + $0x8] sm:$0xf]
        %v349 = vld [vmem:[#allocation6 + $0xc] sm:$0xf]
        %v350 = vld [vmem:[#allocation6 + $0x10] sm:$0xf]
        %v351 = vld [vmem:[#allocation6 + $0x14] sm:$0xf]
        %v352 = vld [vmem:[#allocation6 + $0x18] sm:$0xf]
        %v353 = vld [vmem:[#allocation6 + $0x1c] sm:$0xf]
        %v354 = vld [vmem:[#allocation8] sm:$0x1]
        %v356 = vlaneseq
        %v357 = vshrl.u32 %v356, 7
        %v358 = vsub.s32 0, %v357
        %v359 = vrot.slane %v354, %v358
        %v369 = vunpack.c.l.b16 %v346
        %v370 = vunpack.c.l.b16 %v347
        %v371 = vunpack.c.l.b16 %v348
        %v372 = vunpack.c.l.b16 %v349
        %v373 = vunpack.c.l.b16 %v350
        %v374 = vunpack.c.l.b16 %v351
        %v375 = vunpack.c.l.b16 %v352
        %v376 = vunpack.c.l.b16 %v353
        %v377 = vpack.c.b16 %v370, %v369
        %v378 = vpack.c.b16 %v372, %v371
        %v379 = vpack.c.b16 %v374, %v373
        %v380 = vpack.c.b16 %v376, %v375
        %vm385 = vcmask 523264
        %v387 = vsel %vm385, %v330, 0
        %v390 = vsel %vm385, %v331, 0
        %v393 = vsel %vm385, %v332, 0
        %v396 = vsel %vm385, %v333, 0
        %v399 = vsel %vm385, %v334, 0
        %v402 = vsel %vm385, %v335, 0
        %v405 = vsel %vm385, %v336, 0
        %v408 = vsel %vm385, %v337, 0
        %v411 = vsel %vm385, %v338, 0
        %v414 = vsel %vm385, %v339, 0
        %v417 = vsel %vm385, %v340, 0
        %v420 = vsel %vm385, %v341, 0
        %v423 = vsel %vm385, %v342, 0
        %v426 = vsel %vm385, %v343, 0
        %v429 = vsel %vm385, %v344, 0
        %v432 = vsel %vm385, %v345, 0
        %434 = vmatprep.subr.bf16.mxu0 0
        %435 = vmatpush1.bf16.msra.mxu0 %v377
        %436 = vmatprep.subr.bf16.mxu0 0
        %437 = vmatpush1.bf16.msra.mxu0 %v378
        %438 = vmatprep.subr.bf16.mxu0 0
        %439 = vmatpush1.bf16.msra.mxu0 %v379
        %440 = vmatprep.subr.bf16.mxu0 0
        %441 = vmatpush1.bf16.msra.mxu0 %v380
        %442 = vmatprep.subr.bf16.mxu0 0
        %443 = vmatpush1.bf16.msra.mxu0 0
        %444 = vmatprep.subr.bf16.mxu0 0
        %445 = vmatpush1.bf16.msra.mxu0 0
        %446 = vmatprep.subr.bf16.mxu0 0
        %447 = vmatpush1.bf16.msra.mxu0 0
        %448 = vmatprep.subr.bf16.mxu0 0
        %449 = vmatpush1.bf16.msra.mxu0 0
        %450 = vmatprep.subr.bf16.mxu0 0
        %451 = vmatpush1.bf16.msra.mxu0 0
        %452 = vmatprep.subr.bf16.mxu0 0
        %453 = vmatpush1.bf16.msra.mxu0 0
        %454 = vmatprep.subr.bf16.mxu0 0
        %455 = vmatpush1.bf16.msra.mxu0 0
        %456 = vmatprep.subr.bf16.mxu0 0
        %457 = vmatpush1.bf16.msra.mxu0 0
        %458 = vmatprep.subr.bf16.mxu0 0
        %459 = vmatpush1.bf16.msra.mxu0 0
        %460 = vmatprep.subr.bf16.mxu0 0
        %461 = vmatpush1.bf16.msra.mxu0 0
        %462 = vmatprep.subr.bf16.mxu0 0
        %463 = vmatpush1.bf16.msra.mxu0 0
        %464 = vmatprep.subr.bf16.mxu0 0
        %465 = vmatpush1.bf16.msra.mxu0 0
        %466 = vmatprep.mubr.bf16.mxu0 0
        %467 = vmatmul.mubr.bf16.gmra.mrb[0].mxu0 %v387
        %v468 = vpop.f32.mrb[0].mxu0
        %v469 = vadd.f32 %v359, %v468
        %v470 = vpop.f32.mrb[0].mxu0
        %v471 = vpop.f32.mrb[0].mxu0
        %v472 = vadd.f32 %v359, %v471
        %v473 = vpop.f32.mrb[0].mxu0
        %474 = vmatprep.mubr.bf16.mxu0 0
        %475 = vmatmul.mubr.bf16.gmra.mrb[0].mxu0 %v390
        %v476 = vpop.f32.mrb[0].mxu0
        %v477 = vadd.f32 %v359, %v476
        %v478 = vpop.f32.mrb[0].mxu0
        %v479 = vpop.f32.mrb[0].mxu0
        %v480 = vadd.f32 %v359, %v479
        %v481 = vpop.f32.mrb[0].mxu0
        %482 = vmatprep.mubr.bf16.mxu0 0
        %483 = vmatmul.mubr.bf16.gmra.mrb[0].mxu0 %v393
        %v484 = vpop.f32.mrb[0].mxu0
        %v485 = vadd.f32 %v359, %v484
        %v486 = vpop.f32.mrb[0].mxu0
        %v487 = vpop.f32.mrb[0].mxu0
        %v488 = vadd.f32 %v359, %v487
        %v489 = vpop.f32.mrb[0].mxu0
        %490 = vmatprep.mubr.bf16.mxu0 0
        %491 = vmatmul.mubr.bf16.gmra.mrb[0].mxu0 %v396
        %v492 = vpop.f32.mrb[0].mxu0
        %v493 = vadd.f32 %v359, %v492
        %v494 = vpop.f32.mrb[0].mxu0
        %v495 = vpop.f32.mrb[0].mxu0
        %v496 = vadd.f32 %v359, %v495
        %v497 = vpop.f32.mrb[0].mxu0
        %498 = vmatprep.mubr.bf16.mxu0 0
        %499 = vmatmul.mubr.bf16.gmra.mrb[0].mxu0 %v399
        %v500 = vpop.f32.mrb[0].mxu0
        %v501 = vadd.f32 %v359, %v500
        %v502 = vpop.f32.mrb[0].mxu0
        %v503 = vpop.f32.mrb[0].mxu0
        %v504 = vadd.f32 %v359, %v503
        %v505 = vpop.f32.mrb[0].mxu0
        %506 = vmatprep.mubr.bf16.mxu0 0
        %507 = vmatmul.mubr.bf16.gmra.mrb[0].mxu0 %v402
        %v508 = vpop.f32.mrb[0].mxu0
        %v509 = vadd.f32 %v359, %v508
        %v510 = vpop.f32.mrb[0].mxu0
        %v511 = vpop.f32.mrb[0].mxu0
        %v512 = vadd.f32 %v359, %v511
        %v513 = vpop.f32.mrb[0].mxu0
        %514 = vmatprep.mubr.bf16.mxu0 0
        %515 = vmatmul.mubr.bf16.gmra.mrb[0].mxu0 %v405
        %v516 = vpop.f32.mrb[0].mxu0
        %v517 = vadd.f32 %v359, %v516
        %v518 = vpop.f32.mrb[0].mxu0
        %v519 = vpop.f32.mrb[0].mxu0
        %v520 = vadd.f32 %v359, %v519
        %v521 = vpop.f32.mrb[0].mxu0
        %522 = vmatprep.mubr.bf16.mxu0 0
        %523 = vmatmul.mubr.bf16.gmra.mrb[0].mxu0 %v408
        %v524 = vpop.f32.mrb[0].mxu0
        %v525 = vadd.f32 %v359, %v524
        %v526 = vpop.f32.mrb[0].mxu0
        %v527 = vpop.f32.mrb[0].mxu0
        %v528 = vadd.f32 %v359, %v527
        %v529 = vpop.f32.mrb[0].mxu0
        %530 = vmatprep.mubr.bf16.mxu0 0
        %531 = vmatmul.mubr.bf16.gmra.mrb[0].mxu0 %v411
        %v532 = vpop.f32.mrb[0].mxu0
        %v533 = vadd.f32 %v359, %v532
        %v534 = vpop.f32.mrb[0].mxu0
        %v535 = vpop.f32.mrb[0].mxu0
        %v536 = vadd.f32 %v359, %v535
        %v537 = vpop.f32.mrb[0].mxu0
        %538 = vmatprep.mubr.bf16.mxu0 0
        %539 = vmatmul.mubr.bf16.gmra.mrb[0].mxu0 %v414
        %v540 = vpop.f32.mrb[0].mxu0
        %v541 = vadd.f32 %v359, %v540
        %v542 = vpop.f32.mrb[0].mxu0
        %v543 = vpop.f32.mrb[0].mxu0
        %v544 = vadd.f32 %v359, %v543
        %v545 = vpop.f32.mrb[0].mxu0
        %546 = vmatprep.mubr.bf16.mxu0 0
        %547 = vmatmul.mubr.bf16.gmra.mrb[0].mxu0 %v417
        %v548 = vpop.f32.mrb[0].mxu0
        %v549 = vadd.f32 %v359, %v548
        %v550 = vpop.f32.mrb[0].mxu0
        %v551 = vpop.f32.mrb[0].mxu0
        %v552 = vadd.f32 %v359, %v551
        %v553 = vpop.f32.mrb[0].mxu0
        %554 = vmatprep.mubr.bf16.mxu0 0
        %555 = vmatmul.mubr.bf16.gmra.mrb[0].mxu0 %v420
        %v556 = vpop.f32.mrb[0].mxu0
        %v557 = vadd.f32 %v359, %v556
        %v558 = vpop.f32.mrb[0].mxu0
        %v559 = vpop.f32.mrb[0].mxu0
        %v560 = vadd.f32 %v359, %v559
        %v561 = vpop.f32.mrb[0].mxu0
        %562 = vmatprep.mubr.bf16.mxu0 0
        %563 = vmatmul.mubr.bf16.gmra.mrb[0].mxu0 %v423
        %v564 = vpop.f32.mrb[0].mxu0
        %v565 = vadd.f32 %v359, %v564
        %v566 = vpop.f32.mrb[0].mxu0
        %v567 = vpop.f32.mrb[0].mxu0
        %v568 = vadd.f32 %v359, %v567
        %v569 = vpop.f32.mrb[0].mxu0
        %570 = vmatprep.mubr.bf16.mxu0 0
        %571 = vmatmul.mubr.bf16.gmra.mrb[0].mxu0 %v426
        %v572 = vpop.f32.mrb[0].mxu0
        %v573 = vadd.f32 %v359, %v572
        %v574 = vpop.f32.mrb[0].mxu0
        %v575 = vpop.f32.mrb[0].mxu0
        %v576 = vadd.f32 %v359, %v575
        %v577 = vpop.f32.mrb[0].mxu0
        %578 = vmatprep.mubr.bf16.mxu0 0
        %579 = vmatmul.mubr.bf16.gmra.mrb[0].mxu0 %v429
        %v580 = vpop.f32.mrb[0].mxu0
        %v581 = vadd.f32 %v359, %v580
        %v582 = vpop.f32.mrb[0].mxu0
        %v583 = vpop.f32.mrb[0].mxu0
        %v584 = vadd.f32 %v359, %v583
        %v585 = vpop.f32.mrb[0].mxu0
        %586 = vmatprep.mubr.bf16.mxu0 0
        %587 = vmatmul.mubr.bf16.gmra.mrb[0].mxu0 %v432
        %v588 = vpop.f32.mrb[0].mxu0
        %v589 = vadd.f32 %v359, %v588
        %v590 = vpop.f32.mrb[0].mxu0
        %v591 = vpop.f32.mrb[0].mxu0
        %v592 = vadd.f32 %v359, %v591
        %v593 = vpop.f32.mrb[0].mxu0
        %594 = vdwg.mxu0
        %v595 = vxor.u32 %v469, 2147483648
        %v596 = vxor.u32 %v472, 2147483648
        %v597 = vxor.u32 %v477, 2147483648
        %v598 = vxor.u32 %v480, 2147483648
        %v599 = vxor.u32 %v485, 2147483648
        %v600 = vxor.u32 %v488, 2147483648
        %v601 = vxor.u32 %v493, 2147483648
        %v602 = vxor.u32 %v496, 2147483648
        %v603 = vxor.u32 %v501, 2147483648
        %v604 = vxor.u32 %v504, 2147483648
        %v605 = vxor.u32 %v509, 2147483648
        %v606 = vxor.u32 %v512, 2147483648
        %v607 = vxor.u32 %v517, 2147483648
        %v608 = vxor.u32 %v520, 2147483648
        %v609 = vxor.u32 %v525, 2147483648
        %v610 = vxor.u32 %v528, 2147483648
        %v611 = vxor.u32 %v533, 2147483648
        %v612 = vxor.u32 %v536, 2147483648
        %v613 = vxor.u32 %v541, 2147483648
        %v614 = vxor.u32 %v544, 2147483648
        %v615 = vxor.u32 %v549, 2147483648
        %v616 = vxor.u32 %v552, 2147483648
        %v617 = vxor.u32 %v557, 2147483648
        %v618 = vxor.u32 %v560, 2147483648
        %v619 = vxor.u32 %v565, 2147483648
        %v620 = vxor.u32 %v568, 2147483648
        %v621 = vxor.u32 %v573, 2147483648
        %v622 = vxor.u32 %v576, 2147483648
        %v623 = vxor.u32 %v581, 2147483648
        %v624 = vxor.u32 %v584, 2147483648
        %v625 = vxor.u32 %v589, 2147483648
        %v626 = vxor.u32 %v592, 2147483648
        %v627 = vmul.f32 %v595, 1.442695
        %v628 = vpow.pop %v627
        %v629 = vmul.f32 %v596, 1.442695
        %v630 = vpow.pop %v629
        %v631 = vmul.f32 %v597, 1.442695
        %v632 = vpow.pop %v631
        %v633 = vmul.f32 %v598, 1.442695
        %v634 = vpow.pop %v633
        %v635 = vmul.f32 %v599, 1.442695
        %v636 = vpow.pop %v635
        %v637 = vmul.f32 %v600, 1.442695
        %v638 = vpow.pop %v637
        %v639 = vmul.f32 %v601, 1.442695
        %v640 = vpow.pop %v639
        %v641 = vmul.f32 %v602, 1.442695
        %v642 = vpow.pop %v641
        %v643 = vmul.f32 %v603, 1.442695
        %v644 = vpow.pop %v643
        %v645 = vmul.f32 %v604, 1.442695
        %v646 = vpow.pop %v645
        %v647 = vmul.f32 %v605, 1.442695
        %v648 = vpow.pop %v647
        %v649 = vmul.f32 %v606, 1.442695
        %v650 = vpow.pop %v649
        %v651 = vmul.f32 %v607, 1.442695
        %v652 = vpow.pop %v651
        %v653 = vmul.f32 %v608, 1.442695
        %v654 = vpow.pop %v653
        %v655 = vmul.f32 %v609, 1.442695
        %v656 = vpow.pop %v655
        %v657 = vmul.f32 %v610, 1.442695
        %v658 = vpow.pop %v657
        %v659 = vmul.f32 %v611, 1.442695
        %v660 = vpow.pop %v659
        %v661 = vmul.f32 %v612, 1.442695
        %v662 = vpow.pop %v661
        %v663 = vmul.f32 %v613, 1.442695
        %v664 = vpow.pop %v663
        %v665 = vmul.f32 %v614, 1.442695
        %v666 = vpow.pop %v665
        %v667 = vmul.f32 %v615, 1.442695
        %v668 = vpow.pop %v667
        %v669 = vmul.f32 %v616, 1.442695
        %v670 = vpow.pop %v669
        %v671 = vmul.f32 %v617, 1.442695
        %v672 = vpow.pop %v671
        %v673 = vmul.f32 %v618, 1.442695
        %v674 = vpow.pop %v673
        %v675 = vmul.f32 %v619, 1.442695
        %v676 = vpow.pop %v675
        %v677 = vmul.f32 %v620, 1.442695
        %v678 = vpow.pop %v677
        %v679 = vmul.f32 %v621, 1.442695
        %v680 = vpow.pop %v679
        %v681 = vmul.f32 %v622, 1.442695
        %v682 = vpow.pop %v681
        %v683 = vmul.f32 %v623, 1.442695
        %v684 = vpow.pop %v683
        %v685 = vmul.f32 %v624, 1.442695
        %v686 = vpow.pop %v685
        %v687 = vmul.f32 %v625, 1.442695
        %v688 = vpow.pop %v687
        %v689 = vmul.f32 %v626, 1.442695
        %v690 = vpow.pop %v689
        %v691 = vadd.f32 %v628, 1.0
        %v692 = vadd.f32 %v630, 1.0
        %v693 = vadd.f32 %v632, 1.0
        %v694 = vadd.f32 %v634, 1.0
        %v695 = vadd.f32 %v636, 1.0
        %v696 = vadd.f32 %v638, 1.0
        %v697 = vadd.f32 %v640, 1.0
        %v698 = vadd.f32 %v642, 1.0
        %v699 = vadd.f32 %v644, 1.0
        %v700 = vadd.f32 %v646, 1.0
        %v701 = vadd.f32 %v648, 1.0
        %v702 = vadd.f32 %v650, 1.0
        %v703 = vadd.f32 %v652, 1.0
        %v704 = vadd.f32 %v654, 1.0
        %v705 = vadd.f32 %v656, 1.0
        %v706 = vadd.f32 %v658, 1.0
        %v707 = vadd.f32 %v660, 1.0
        %v708 = vadd.f32 %v662, 1.0
        %v709 = vadd.f32 %v664, 1.0
        %v710 = vadd.f32 %v666, 1.0
        %v711 = vadd.f32 %v668, 1.0
        %v712 = vadd.f32 %v670, 1.0
        %v713 = vadd.f32 %v672, 1.0
        %v714 = vadd.f32 %v674, 1.0
        %v715 = vadd.f32 %v676, 1.0
        %v716 = vadd.f32 %v678, 1.0
        %v717 = vadd.f32 %v680, 1.0
        %v718 = vadd.f32 %v682, 1.0
        %v719 = vadd.f32 %v684, 1.0
        %v720 = vadd.f32 %v686, 1.0
        %v721 = vadd.f32 %v688, 1.0
        %v722 = vadd.f32 %v690, 1.0
        %v723 = vrcp.pop %v691
        %v724 = vmul.f32 1.0, %v723
        %v725 = vrcp.pop %v692
        %v726 = vmul.f32 1.0, %v725
        %v727 = vrcp.pop %v693
        %v728 = vmul.f32 1.0, %v727
        %v729 = vrcp.pop %v694
        %v730 = vmul.f32 1.0, %v729
        %v731 = vrcp.pop %v695
        %v732 = vmul.f32 1.0, %v731
        %v733 = vrcp.pop %v696
        %v734 = vmul.f32 1.0, %v733
        %v735 = vrcp.pop %v697
        %v736 = vmul.f32 1.0, %v735
        %v737 = vrcp.pop %v698
        %v738 = vmul.f32 1.0, %v737
        %v739 = vrcp.pop %v699
        %v740 = vmul.f32 1.0, %v739
        %v741 = vrcp.pop %v700
        %v742 = vmul.f32 1.0, %v741
        %v743 = vrcp.pop %v701
        %v744 = vmul.f32 1.0, %v743
        %v745 = vrcp.pop %v702
        %v746 = vmul.f32 1.0, %v745
        %v747 = vrcp.pop %v703
        %v748 = vmul.f32 1.0, %v747
        %v749 = vrcp.pop %v704
        %v750 = vmul.f32 1.0, %v749
        %v751 = vrcp.pop %v705
        %v752 = vmul.f32 1.0, %v751
        %v753 = vrcp.pop %v706
        %v754 = vmul.f32 1.0, %v753
        %v755 = vrcp.pop %v707
        %v756 = vmul.f32 1.0, %v755
        %v757 = vrcp.pop %v708
        %v758 = vmul.f32 1.0, %v757
        %v759 = vrcp.pop %v709
        %v760 = vmul.f32 1.0, %v759
        %v761 = vrcp.pop %v710
        %v762 = vmul.f32 1.0, %v761
        %v763 = vrcp.pop %v711
        %v764 = vmul.f32 1.0, %v763
        %v765 = vrcp.pop %v712
        %v766 = vmul.f32 1.0, %v765
        %v767 = vrcp.pop %v713
        %v768 = vmul.f32 1.0, %v767
        %v769 = vrcp.pop %v714
        %v770 = vmul.f32 1.0, %v769
        %v771 = vrcp.pop %v715
        %v772 = vmul.f32 1.0, %v771
        %v773 = vrcp.pop %v716
        %v774 = vmul.f32 1.0, %v773
        %v775 = vrcp.pop %v717
        %v776 = vmul.f32 1.0, %v775
        %v777 = vrcp.pop %v718
        %v778 = vmul.f32 1.0, %v777
        %v779 = vrcp.pop %v719
        %v780 = vmul.f32 1.0, %v779
        %v781 = vrcp.pop %v720
        %v782 = vmul.f32 1.0, %v781
        %v783 = vrcp.pop %v721
        %v784 = vmul.f32 1.0, %v783
        %v785 = vrcp.pop %v722
        %v786 = vmul.f32 1.0, %v785
        %v787 = vmul.f32 %v469, %v724
        %v788 = vmul.f32 %v472, %v726
        %v789 = vmul.f32 %v477, %v728
        %v790 = vmul.f32 %v480, %v730
        %v791 = vmul.f32 %v485, %v732
        %v792 = vmul.f32 %v488, %v734
        %v793 = vmul.f32 %v493, %v736
        %v794 = vmul.f32 %v496, %v738
        %v795 = vmul.f32 %v501, %v740
        %v796 = vmul.f32 %v504, %v742
        %v797 = vmul.f32 %v509, %v744
        %v798 = vmul.f32 %v512, %v746
        %v799 = vmul.f32 %v517, %v748
        %v800 = vmul.f32 %v520, %v750
        %v801 = vmul.f32 %v525, %v752
        %v802 = vmul.f32 %v528, %v754
        %v803 = vmul.f32 %v533, %v756
        %v804 = vmul.f32 %v536, %v758
        %v805 = vmul.f32 %v541, %v760
        %v806 = vmul.f32 %v544, %v762
        %v807 = vmul.f32 %v549, %v764
        %v808 = vmul.f32 %v552, %v766
        %v809 = vmul.f32 %v557, %v768
        %v810 = vmul.f32 %v560, %v770
        %v811 = vmul.f32 %v565, %v772
        %v812 = vmul.f32 %v568, %v774
        %v813 = vmul.f32 %v573, %v776
        %v814 = vmul.f32 %v576, %v778
        %v815 = vmul.f32 %v581, %v780
        %v816 = vmul.f32 %v584, %v782
        %v817 = vmul.f32 %v589, %v784
        %v818 = vmul.f32 %v592, %v786
        %vm819 = vcmask 257024
        %820 = vst.msk [vmem:[#allocation2] sm:$0xf] %vm819, 0
        %821 = vst.msk [vmem:[#allocation2 + $0x4] sm:$0xf] %vm819, 0
        %vm822 = vcmask 253952
        %823 = vst.msk [vmem:[#allocation2 + $0x8] sm:$0x1] %vm822, 0
        %s824 = scalar_lea.vmem [#allocation2], 204
        %825 = vst.msk [vmem:[%s824] sm:$0xf] %vm819, 0
        %826 = vst.msk [vmem:[%s824 + $0x4] sm:$0xf] %vm819, 0
        %827 = vst.msk [vmem:[%s824 + $0x8] sm:$0x1] %vm822, 0
        %s828 = scalar_lea.vmem [#allocation2], 12
        %vm829 = vcmask 253952
        %vm830 = vsmask.f32 256
        %vm831 = vmand %vm829, %vm830
        %v832 = vld [vmem:[%s828] sm:$0x1]
        %v833 = vsel %vm831, 0, %v832
        %834 = vst [vmem:[%s828] sm:$0x1] %v833
        %v835 = vld [vmem:[%s828 + $0xc] sm:$0x1]
        %v836 = vsel %vm831, 0, %v835
        %837 = vst [vmem:[%s828 + $0xc] sm:$0x1] %v836
        %v838 = vld [vmem:[%s828 + $0x18] sm:$0x1]
        %v839 = vsel %vm831, 0, %v838
        %840 = vst [vmem:[%s828 + $0x18] sm:$0x1] %v839
        %v841 = vld [vmem:[%s828 + $0x24] sm:$0x1]
        %v842 = vsel %vm831, 0, %v841
        %843 = vst [vmem:[%s828 + $0x24] sm:$0x1] %v842
        %v844 = vld [vmem:[%s828 + $0x30] sm:$0x1]
        %v845 = vsel %vm831, 0, %v844
        %846 = vst [vmem:[%s828 + $0x30] sm:$0x1] %v845
        %v847 = vld [vmem:[%s828 + $0x3c] sm:$0x1]
        %v848 = vsel %vm831, 0, %v847
        %849 = vst [vmem:[%s828 + $0x3c] sm:$0x1] %v848
        %v850 = vld [vmem:[%s828 + $0x48] sm:$0x1]
        %v851 = vsel %vm831, 0, %v850
        %852 = vst [vmem:[%s828 + $0x48] sm:$0x1] %v851
        %v853 = vld [vmem:[%s828 + $0x54] sm:$0x1]
        %v854 = vsel %vm831, 0, %v853
        %855 = vst [vmem:[%s828 + $0x54] sm:$0x1] %v854
        %v856 = vld [vmem:[%s828 + $0x60] sm:$0x1]
        %v857 = vsel %vm831, 0, %v856
        %858 = vst [vmem:[%s828 + $0x60] sm:$0x1] %v857
        %v859 = vld [vmem:[%s828 + $0x6c] sm:$0x1]
        %v860 = vsel %vm831, 0, %v859
        %861 = vst [vmem:[%s828 + $0x6c] sm:$0x1] %v860
        %v862 = vld [vmem:[%s828 + $0x78] sm:$0x1]
        %v863 = vsel %vm831, 0, %v862
        %864 = vst [vmem:[%s828 + $0x78] sm:$0x1] %v863
        %v865 = vld [vmem:[%s828 + $0x84] sm:$0x1]
        %v866 = vsel %vm831, 0, %v865
        %867 = vst [vmem:[%s828 + $0x84] sm:$0x1] %v866
        %v868 = vld [vmem:[%s828 + $0x90] sm:$0x1]
        %v869 = vsel %vm831, 0, %v868
        %870 = vst [vmem:[%s828 + $0x90] sm:$0x1] %v869
        %v871 = vld [vmem:[%s828 + $0x9c] sm:$0x1]
        %v872 = vsel %vm831, 0, %v871
        %873 = vst [vmem:[%s828 + $0x9c] sm:$0x1] %v872
        %v874 = vld [vmem:[%s828 + $0xa8] sm:$0x1]
        %v875 = vsel %vm831, 0, %v874
        %876 = vst [vmem:[%s828 + $0xa8] sm:$0x1] %v875
        %v877 = vld [vmem:[%s828 + $0xb4] sm:$0x1]
        %v878 = vsel %vm831, 0, %v877
        %879 = vst [vmem:[%s828 + $0xb4] sm:$0x1] %v878
        %vm880 = vsmask.f32 7938
        %vm881 = vmand %vm829, %vm880
        %v882 = vld [vmem:[%s828 + $0x8] sm:$0x1]
        %v883 = vsel %vm881, 0, %v882
        %884 = vst [vmem:[%s828 + $0x8] sm:$0x1] %v883
        %v885 = vld [vmem:[%s828 + $0x14] sm:$0x1]
        %v886 = vsel %vm881, 0, %v885
        %887 = vst [vmem:[%s828 + $0x14] sm:$0x1] %v886
        %v888 = vld [vmem:[%s828 + $0x20] sm:$0x1]
        %v889 = vsel %vm881, 0, %v888
        %890 = vst [vmem:[%s828 + $0x20] sm:$0x1] %v889
        %v891 = vld [vmem:[%s828 + $0x2c] sm:$0x1]
        %v892 = vsel %vm881, 0, %v891
        %893 = vst [vmem:[%s828 + $0x2c] sm:$0x1] %v892
        %v894 = vld [vmem:[%s828 + $0x38] sm:$0x1]
        %v895 = vsel %vm881, 0, %v894
        %896 = vst [vmem:[%s828 + $0x38] sm:$0x1] %v895
        %v897 = vld [vmem:[%s828 + $0x44] sm:$0x1]
        %v898 = vsel %vm881, 0, %v897
        %899 = vst [vmem:[%s828 + $0x44] sm:$0x1] %v898
        %v900 = vld [vmem:[%s828 + $0x50] sm:$0x1]
        %v901 = vsel %vm881, 0, %v900
        %902 = vst [vmem:[%s828 + $0x50] sm:$0x1] %v901
        %v903 = vld [vmem:[%s828 + $0x5c] sm:$0x1]
        %v904 = vsel %vm881, 0, %v903
        %905 = vst [vmem:[%s828 + $0x5c] sm:$0x1] %v904
        %v906 = vld [vmem:[%s828 + $0x68] sm:$0x1]
        %v907 = vsel %vm881, 0, %v906
        %908 = vst [vmem:[%s828 + $0x68] sm:$0x1] %v907
        %v909 = vld [vmem:[%s828 + $0x74] sm:$0x1]
        %v910 = vsel %vm881, 0, %v909
        %911 = vst [vmem:[%s828 + $0x74] sm:$0x1] %v910
        %v912 = vld [vmem:[%s828 + $0x80] sm:$0x1]
        %v913 = vsel %vm881, 0, %v912
        %914 = vst [vmem:[%s828 + $0x80] sm:$0x1] %v913
        %v915 = vld [vmem:[%s828 + $0x8c] sm:$0x1]
        %v916 = vsel %vm881, 0, %v915
        %917 = vst [vmem:[%s828 + $0x8c] sm:$0x1] %v916
        %v918 = vld [vmem:[%s828 + $0x98] sm:$0x1]
        %v919 = vsel %vm881, 0, %v918
        %920 = vst [vmem:[%s828 + $0x98] sm:$0x1] %v919
        %v921 = vld [vmem:[%s828 + $0xa4] sm:$0x1]
        %v922 = vsel %vm881, 0, %v921
        %923 = vst [vmem:[%s828 + $0xa4] sm:$0x1] %v922
        %v924 = vld [vmem:[%s828 + $0xb0] sm:$0x1]
        %v925 = vsel %vm881, 0, %v924
        %926 = vst [vmem:[%s828 + $0xb0] sm:$0x1] %v925
        %v927 = vld [vmem:[%s828 + $0xbc] sm:$0x1]
        %v928 = vsel %vm881, 0, %v927
        %929 = vst [vmem:[%s828 + $0xbc] sm:$0x1] %v928
        %v930 = vpack.c.bf16 %v788, %v787
        %v931 = vpack.c.bf16 %v790, %v789
        %v932 = vpack.c.bf16 %v792, %v791
        %v933 = vpack.c.bf16 %v794, %v793
        %v934 = vpack.c.bf16 %v796, %v795
        %v935 = vpack.c.bf16 %v798, %v797
        %v936 = vpack.c.bf16 %v800, %v799
        %v937 = vpack.c.bf16 %v802, %v801
        %v938 = vpack.c.bf16 %v804, %v803
        %v939 = vpack.c.bf16 %v806, %v805
        %v940 = vpack.c.bf16 %v808, %v807
        %v941 = vpack.c.bf16 %v810, %v809
        %v942 = vpack.c.bf16 %v812, %v811
        %v943 = vpack.c.bf16 %v814, %v813
        %v944 = vpack.c.bf16 %v816, %v815
        %v945 = vpack.c.bf16 %v818, %v817
        %v962 = vunpack.c.l.b16 %v930
        %v963 = vunpack.c.h.b16 %v930
        %v964 = vunpack.c.l.b16 %v931
        %v965 = vunpack.c.h.b16 %v931
        %v966 = vunpack.c.l.b16 %v932
        %v967 = vunpack.c.h.b16 %v932
        %v968 = vunpack.c.l.b16 %v933
        %v969 = vunpack.c.h.b16 %v933
        %v970 = vunpack.c.l.b16 %v934
        %v971 = vunpack.c.h.b16 %v934
        %v972 = vunpack.c.l.b16 %v935
        %v973 = vunpack.c.h.b16 %v935
        %v974 = vunpack.c.l.b16 %v936
        %v975 = vunpack.c.h.b16 %v936
        %v976 = vunpack.c.l.b16 %v937
        %v977 = vunpack.c.h.b16 %v937
        %v978 = vunpack.c.l.b16 %v938
        %v979 = vunpack.c.h.b16 %v938
        %v980 = vunpack.c.l.b16 %v939
        %v981 = vunpack.c.h.b16 %v939
        %v982 = vunpack.c.l.b16 %v940
        %v983 = vunpack.c.h.b16 %v940
        %v984 = vunpack.c.l.b16 %v941
        %v985 = vunpack.c.h.b16 %v941
        %v986 = vunpack.c.l.b16 %v942
        %v987 = vunpack.c.h.b16 %v942
        %v988 = vunpack.c.l.b16 %v943
        %v989 = vunpack.c.h.b16 %v943
        %v990 = vunpack.c.l.b16 %v944
        %v991 = vunpack.c.h.b16 %v944
        %v992 = vunpack.c.l.b16 %v945
        %v993 = vunpack.c.h.b16 %v945
        %v994 = vpack.c.b16 %v962, %v962
        %v995 = vpack.c.b16 %v963, %v963
        %v996 = vpack.c.b16 %v964, %v964
        %v997 = vpack.c.b16 %v965, %v965
        %v998 = vpack.c.b16 %v966, %v966
        %v999 = vpack.c.b16 %v967, %v967
        %v1000 = vpack.c.b16 %v968, %v968
        %v1001 = vpack.c.b16 %v969, %v969
        %v1002 = vpack.c.b16 %v970, %v970
        %v1003 = vpack.c.b16 %v971, %v971
        %v1004 = vpack.c.b16 %v972, %v972
        %v1005 = vpack.c.b16 %v973, %v973
        %v1006 = vpack.c.b16 %v974, %v974
        %v1007 = vpack.c.b16 %v975, %v975
        %v1008 = vpack.c.b16 %v976, %v976
        %v1009 = vpack.c.b16 %v977, %v977
        %v1010 = vpack.c.b16 %v978, %v978
        %v1011 = vpack.c.b16 %v979, %v979
        %v1012 = vpack.c.b16 %v980, %v980
        %v1013 = vpack.c.b16 %v981, %v981
        %v1014 = vpack.c.b16 %v982, %v982
        %v1015 = vpack.c.b16 %v983, %v983
        %v1016 = vpack.c.b16 %v984, %v984
        %v1017 = vpack.c.b16 %v985, %v985
        %v1018 = vpack.c.b16 %v986, %v986
        %v1019 = vpack.c.b16 %v987, %v987
        %v1020 = vpack.c.b16 %v988, %v988
        %v1021 = vpack.c.b16 %v989, %v989
        %v1022 = vpack.c.b16 %v990, %v990
        %v1023 = vpack.c.b16 %v991, %v991
        %v1024 = vpack.c.b16 %v992, %v992
        %v1025 = vpack.c.b16 %v993, %v993
        %vm1026 = vsmask.f32 4368
        %vm1027 = vmor %vm830, %vm1026
        %v1029 = vshrl.u32 %v994, 16
        %v1031 = vrot.slane %v1029, 7
        %v1032 = vshll.u32 %v994, 16
        %v1034 = vor.u32 %v1031, %v1032
        %v1035 = vrot.slane %v1031, 4
        %v1037 = vshrl.u32 %v995, 16
        %v1039 = vrot.slane %v1037, 7
        %v1040 = vshll.u32 %v995, 16
        %v1042 = vor.u32 %v1039, %v1040
        %v1043 = vsel %vm1027, %v1035, %v1042
        %v1044 = vrot.slane %v1039, 4
        %v1046 = vshrl.u32 %v996, 16
        %v1048 = vrot.slane %v1046, 7
        %v1049 = vshll.u32 %v996, 16
        %v1051 = vor.u32 %v1048, %v1049
        %v1052 = vrot.slane %v1048, 4
        %v1054 = vshrl.u32 %v997, 16
        %v1056 = vrot.slane %v1054, 7
        %v1057 = vshll.u32 %v997, 16
        %v1059 = vor.u32 %v1056, %v1057
        %v1060 = vsel %vm1027, %v1052, %v1059
        %v1061 = vrot.slane %v1056, 4
        %v1063 = vshrl.u32 %v998, 16
        %v1065 = vrot.slane %v1063, 7
        %v1066 = vshll.u32 %v998, 16
        %v1068 = vor.u32 %v1065, %v1066
        %v1069 = vrot.slane %v1065, 4
        %v1071 = vshrl.u32 %v999, 16
        %v1073 = vrot.slane %v1071, 7
        %v1074 = vshll.u32 %v999, 16
        %v1076 = vor.u32 %v1073, %v1074
        %v1077 = vsel %vm1027, %v1069, %v1076
        %v1078 = vrot.slane %v1073, 4
        %v1080 = vshrl.u32 %v1000, 16
        %v1082 = vrot.slane %v1080, 7
        %v1083 = vshll.u32 %v1000, 16
        %v1085 = vor.u32 %v1082, %v1083
        %v1086 = vrot.slane %v1082, 4
        %v1088 = vshrl.u32 %v1001, 16
        %v1090 = vrot.slane %v1088, 7
        %v1091 = vshll.u32 %v1001, 16
        %v1093 = vor.u32 %v1090, %v1091
        %v1094 = vsel %vm1027, %v1086, %v1093
        %v1095 = vrot.slane %v1090, 4
        %v1097 = vshrl.u32 %v1002, 16
        %v1099 = vrot.slane %v1097, 7
        %v1100 = vshll.u32 %v1002, 16
        %v1102 = vor.u32 %v1099, %v1100
        %v1103 = vrot.slane %v1099, 4
        %v1105 = vshrl.u32 %v1003, 16
        %v1107 = vrot.slane %v1105, 7
        %v1108 = vshll.u32 %v1003, 16
        %v1110 = vor.u32 %v1107, %v1108
        %v1111 = vsel %vm1027, %v1103, %v1110
        %v1112 = vrot.slane %v1107, 4
        %v1114 = vshrl.u32 %v1004, 16
        %v1116 = vrot.slane %v1114, 7
        %v1117 = vshll.u32 %v1004, 16
        %v1119 = vor.u32 %v1116, %v1117
        %v1120 = vrot.slane %v1116, 4
        %v1122 = vshrl.u32 %v1005, 16
        %v1124 = vrot.slane %v1122, 7
        %v1125 = vshll.u32 %v1005, 16
        %v1127 = vor.u32 %v1124, %v1125
        %v1128 = vsel %vm1027, %v1120, %v1127
        %v1129 = vrot.slane %v1124, 4
        %v1131 = vshrl.u32 %v1006, 16
        %v1133 = vrot.slane %v1131, 7
        %v1134 = vshll.u32 %v1006, 16
        %v1136 = vor.u32 %v1133, %v1134
        %v1137 = vrot.slane %v1133, 4
        %v1139 = vshrl.u32 %v1007, 16
        %v1141 = vrot.slane %v1139, 7
        %v1142 = vshll.u32 %v1007, 16
        %v1144 = vor.u32 %v1141, %v1142
        %v1145 = vsel %vm1027, %v1137, %v1144
        %v1146 = vrot.slane %v1141, 4
        %v1148 = vshrl.u32 %v1008, 16
        %v1150 = vrot.slane %v1148, 7
        %v1151 = vshll.u32 %v1008, 16
        %v1153 = vor.u32 %v1150, %v1151
        %v1154 = vrot.slane %v1150, 4
        %v1156 = vshrl.u32 %v1009, 16
        %v1158 = vrot.slane %v1156, 7
        %v1159 = vshll.u32 %v1009, 16
        %v1161 = vor.u32 %v1158, %v1159
        %v1162 = vsel %vm1027, %v1154, %v1161
        %v1163 = vrot.slane %v1158, 4
        %v1165 = vshrl.u32 %v1010, 16
        %v1167 = vrot.slane %v1165, 7
        %v1168 = vshll.u32 %v1010, 16
        %v1170 = vor.u32 %v1167, %v1168
        %v1171 = vrot.slane %v1167, 4
        %v1173 = vshrl.u32 %v1011, 16
        %v1175 = vrot.slane %v1173, 7
        %v1176 = vshll.u32 %v1011, 16
        %v1178 = vor.u32 %v1175, %v1176
        %v1179 = vsel %vm1027, %v1171, %v1178
        %v1180 = vrot.slane %v1175, 4
        %v1182 = vshrl.u32 %v1012, 16
        %v1184 = vrot.slane %v1182, 7
        %v1185 = vshll.u32 %v1012, 16
        %v1187 = vor.u32 %v1184, %v1185
        %v1188 = vrot.slane %v1184, 4
        %v1190 = vshrl.u32 %v1013, 16
        %v1192 = vrot.slane %v1190, 7
        %v1193 = vshll.u32 %v1013, 16
        %v1195 = vor.u32 %v1192, %v1193
        %v1196 = vsel %vm1027, %v1188, %v1195
        %v1197 = vrot.slane %v1192, 4
        %v1199 = vshrl.u32 %v1014, 16
        %v1201 = vrot.slane %v1199, 7
        %v1202 = vshll.u32 %v1014, 16
        %v1204 = vor.u32 %v1201, %v1202
        %v1205 = vrot.slane %v1201, 4
        %v1207 = vshrl.u32 %v1015, 16
        %v1209 = vrot.slane %v1207, 7
        %v1210 = vshll.u32 %v1015, 16
        %v1212 = vor.u32 %v1209, %v1210
        %v1213 = vsel %vm1027, %v1205, %v1212
        %v1214 = vrot.slane %v1209, 4
        %v1216 = vshrl.u32 %v1016, 16
        %v1218 = vrot.slane %v1216, 7
        %v1219 = vshll.u32 %v1016, 16
        %v1221 = vor.u32 %v1218, %v1219
        %v1222 = vrot.slane %v1218, 4
        %v1224 = vshrl.u32 %v1017, 16
        %v1226 = vrot.slane %v1224, 7
        %v1227 = vshll.u32 %v1017, 16
        %v1229 = vor.u32 %v1226, %v1227
        %v1230 = vsel %vm1027, %v1222, %v1229
        %v1231 = vrot.slane %v1226, 4
        %v1233 = vshrl.u32 %v1018, 16
        %v1235 = vrot.slane %v1233, 7
        %v1236 = vshll.u32 %v1018, 16
        %v1238 = vor.u32 %v1235, %v1236
        %v1239 = vrot.slane %v1235, 4
        %v1241 = vshrl.u32 %v1019, 16
        %v1243 = vrot.slane %v1241, 7
        %v1244 = vshll.u32 %v1019, 16
        %v1246 = vor.u32 %v1243, %v1244
        %v1247 = vsel %vm1027, %v1239, %v1246
        %v1248 = vrot.slane %v1243, 4
        %v1250 = vshrl.u32 %v1020, 16
        %v1252 = vrot.slane %v1250, 7
        %v1253 = vshll.u32 %v1020, 16
        %v1255 = vor.u32 %v1252, %v1253
        %v1256 = vrot.slane %v1252, 4
        %v1258 = vshrl.u32 %v1021, 16
        %v1260 = vrot.slane %v1258, 7
        %v1261 = vshll.u32 %v1021, 16
        %v1263 = vor.u32 %v1260, %v1261
        %v1264 = vsel %vm1027, %v1256, %v1263
        %v1265 = vrot.slane %v1260, 4
        %v1267 = vshrl.u32 %v1022, 16
        %v1269 = vrot.slane %v1267, 7
        %v1270 = vshll.u32 %v1022, 16
        %v1272 = vor.u32 %v1269, %v1270
        %v1273 = vrot.slane %v1269, 4
        %v1275 = vshrl.u32 %v1023, 16
        %v1277 = vrot.slane %v1275, 7
        %v1278 = vshll.u32 %v1023, 16
        %v1280 = vor.u32 %v1277, %v1278
        %v1281 = vsel %vm1027, %v1273, %v1280
        %v1282 = vrot.slane %v1277, 4
        %v1284 = vshrl.u32 %v1024, 16
        %v1286 = vrot.slane %v1284, 7
        %v1287 = vshll.u32 %v1024, 16
        %v1289 = vor.u32 %v1286, %v1287
        %v1290 = vrot.slane %v1286, 4
        %v1292 = vshrl.u32 %v1025, 16
        %v1294 = vrot.slane %v1292, 7
        %v1295 = vshll.u32 %v1025, 16
        %v1297 = vor.u32 %v1294, %v1295
        %v1298 = vsel %vm1027, %v1290, %v1297
        %v1299 = vrot.slane %v1294, 4
        %vm1348 = vcmask 257024
        %vm1349 = vmand %vm1348, %vm880
        %v1350 = vld [vmem:[%s828] sm:$0xf]
        %v1351 = vsel %vm1349, %v1034, %v1350
        %1352 = vst [vmem:[%s828] sm:$0xf] %v1351
        %1353 = vst.msk [vmem:[%s828 + $0x4] sm:$0xf] %vm819, %v1043
        %v1354 = vld [vmem:[%s828 + $0x8] sm:$0x1]
        %v1355 = vsel %vm831, %v1044, %v1354
        %1356 = vst [vmem:[%s828 + $0x8] sm:$0x1] %v1355
        %v1357 = vld [vmem:[%s828 + $0xc] sm:$0xf]
        %v1358 = vsel %vm1349, %v1051, %v1357
        %1359 = vst [vmem:[%s828 + $0xc] sm:$0xf] %v1358
        %1360 = vst.msk [vmem:[%s828 + $0x10] sm:$0xf] %vm819, %v1060
        %v1361 = vld [vmem:[%s828 + $0x14] sm:$0x1]
        %v1362 = vsel %vm831, %v1061, %v1361
        %1363 = vst [vmem:[%s828 + $0x14] sm:$0x1] %v1362
        %v1364 = vld [vmem:[%s828 + $0x18] sm:$0xf]
        %v1365 = vsel %vm1349, %v1068, %v1364
        %1366 = vst [vmem:[%s828 + $0x18] sm:$0xf] %v1365
        %1367 = vst.msk [vmem:[%s828 + $0x1c] sm:$0xf] %vm819, %v1077
        %v1368 = vld [vmem:[%s828 + $0x20] sm:$0x1]
        %v1369 = vsel %vm831, %v1078, %v1368
        %1370 = vst [vmem:[%s828 + $0x20] sm:$0x1] %v1369
        %v1371 = vld [vmem:[%s828 + $0x24] sm:$0xf]
        %v1372 = vsel %vm1349, %v1085, %v1371
        %1373 = vst [vmem:[%s828 + $0x24] sm:$0xf] %v1372
        %1374 = vst.msk [vmem:[%s828 + $0x28] sm:$0xf] %vm819, %v1094
        %v1375 = vld [vmem:[%s828 + $0x2c] sm:$0x1]
        %v1376 = vsel %vm831, %v1095, %v1375
        %1377 = vst [vmem:[%s828 + $0x2c] sm:$0x1] %v1376
        %v1378 = vld [vmem:[%s828 + $0x30] sm:$0xf]
        %v1379 = vsel %vm1349, %v1102, %v1378
        %1380 = vst [vmem:[%s828 + $0x30] sm:$0xf] %v1379
        %1381 = vst.msk [vmem:[%s828 + $0x34] sm:$0xf] %vm819, %v1111
        %v1382 = vld [vmem:[%s828 + $0x38] sm:$0x1]
        %v1383 = vsel %vm831, %v1112, %v1382
        %1384 = vst [vmem:[%s828 + $0x38] sm:$0x1] %v1383
        %v1385 = vld [vmem:[%s828 + $0x3c] sm:$0xf]
        %v1386 = vsel %vm1349, %v1119, %v1385
        %1387 = vst [vmem:[%s828 + $0x3c] sm:$0xf] %v1386
        %1388 = vst.msk [vmem:[%s828 + $0x40] sm:$0xf] %vm819, %v1128
        %v1389 = vld [vmem:[%s828 + $0x44] sm:$0x1]
        %v1390 = vsel %vm831, %v1129, %v1389
        %1391 = vst [vmem:[%s828 + $0x44] sm:$0x1] %v1390
        %v1392 = vld [vmem:[%s828 + $0x48] sm:$0xf]
        %v1393 = vsel %vm1349, %v1136, %v1392
        %1394 = vst [vmem:[%s828 + $0x48] sm:$0xf] %v1393
        %1395 = vst.msk [vmem:[%s828 + $0x4c] sm:$0xf] %vm819, %v1145
        %v1396 = vld [vmem:[%s828 + $0x50] sm:$0x1]
        %v1397 = vsel %vm831, %v1146, %v1396
        %1398 = vst [vmem:[%s828 + $0x50] sm:$0x1] %v1397
        %v1399 = vld [vmem:[%s828 + $0x54] sm:$0xf]
        %v1400 = vsel %vm1349, %v1153, %v1399
        %1401 = vst [vmem:[%s828 + $0x54] sm:$0xf] %v1400
        %1402 = vst.msk [vmem:[%s828 + $0x58] sm:$0xf] %vm819, %v1162
        %v1403 = vld [vmem:[%s828 + $0x5c] sm:$0x1]
        %v1404 = vsel %vm831, %v1163, %v1403
        %1405 = vst [vmem:[%s828 + $0x5c] sm:$0x1] %v1404
        %v1406 = vld [vmem:[%s828 + $0x60] sm:$0xf]
        %v1407 = vsel %vm1349, %v1170, %v1406
        %1408 = vst [vmem:[%s828 + $0x60] sm:$0xf] %v1407
        %1409 = vst.msk [vmem:[%s828 + $0x64] sm:$0xf] %vm819, %v1179
        %v1410 = vld [vmem:[%s828 + $0x68] sm:$0x1]
        %v1411 = vsel %vm831, %v1180, %v1410
        %1412 = vst [vmem:[%s828 + $0x68] sm:$0x1] %v1411
        %v1413 = vld [vmem:[%s828 + $0x6c] sm:$0xf]
        %v1414 = vsel %vm1349, %v1187, %v1413
        %1415 = vst [vmem:[%s828 + $0x6c] sm:$0xf] %v1414
        %1416 = vst.msk [vmem:[%s828 + $0x70] sm:$0xf] %vm819, %v1196
        %v1417 = vld [vmem:[%s828 + $0x74] sm:$0x1]
        %v1418 = vsel %vm831, %v1197, %v1417
        %1419 = vst [vmem:[%s828 + $0x74] sm:$0x1] %v1418
        %v1420 = vld [vmem:[%s828 + $0x78] sm:$0xf]
        %v1421 = vsel %vm1349, %v1204, %v1420
        %1422 = vst [vmem:[%s828 + $0x78] sm:$0xf] %v1421
        %1423 = vst.msk [vmem:[%s828 + $0x7c] sm:$0xf] %vm819, %v1213
        %v1424 = vld [vmem:[%s828 + $0x80] sm:$0x1]
        %v1425 = vsel %vm831, %v1214, %v1424
        %1426 = vst [vmem:[%s828 + $0x80] sm:$0x1] %v1425
        %v1427 = vld [vmem:[%s828 + $0x84] sm:$0xf]
        %v1428 = vsel %vm1349, %v1221, %v1427
        %1429 = vst [vmem:[%s828 + $0x84] sm:$0xf] %v1428
        %1430 = vst.msk [vmem:[%s828 + $0x88] sm:$0xf] %vm819, %v1230
        %v1431 = vld [vmem:[%s828 + $0x8c] sm:$0x1]
        %v1432 = vsel %vm831, %v1231, %v1431
        %1433 = vst [vmem:[%s828 + $0x8c] sm:$0x1] %v1432
        %v1434 = vld [vmem:[%s828 + $0x90] sm:$0xf]
        %v1435 = vsel %vm1349, %v1238, %v1434
        %1436 = vst [vmem:[%s828 + $0x90] sm:$0xf] %v1435
        %1437 = vst.msk [vmem:[%s828 + $0x94] sm:$0xf] %vm819, %v1247
        %v1438 = vld [vmem:[%s828 + $0x98] sm:$0x1]
        %v1439 = vsel %vm831, %v1248, %v1438
        %1440 = vst [vmem:[%s828 + $0x98] sm:$0x1] %v1439
        %v1441 = vld [vmem:[%s828 + $0x9c] sm:$0xf]
        %v1442 = vsel %vm1349, %v1255, %v1441
        %1443 = vst [vmem:[%s828 + $0x9c] sm:$0xf] %v1442
        %1444 = vst.msk [vmem:[%s828 + $0xa0] sm:$0xf] %vm819, %v1264
        %v1445 = vld [vmem:[%s828 + $0xa4] sm:$0x1]
        %v1446 = vsel %vm831, %v1265, %v1445
        %1447 = vst [vmem:[%s828 + $0xa4] sm:$0x1] %v1446
        %v1448 = vld [vmem:[%s828 + $0xa8] sm:$0xf]
        %v1449 = vsel %vm1349, %v1272, %v1448
        %1450 = vst [vmem:[%s828 + $0xa8] sm:$0xf] %v1449
        %1451 = vst.msk [vmem:[%s828 + $0xac] sm:$0xf] %vm819, %v1281
        %v1452 = vld [vmem:[%s828 + $0xb0] sm:$0x1]
        %v1453 = vsel %vm831, %v1282, %v1452
        %1454 = vst [vmem:[%s828 + $0xb0] sm:$0x1] %v1453
        %v1455 = vld [vmem:[%s828 + $0xb4] sm:$0xf]
        %v1456 = vsel %vm1349, %v1289, %v1455
        %1457 = vst [vmem:[%s828 + $0xb4] sm:$0xf] %v1456
        %1458 = vst.msk [vmem:[%s828 + $0xb8] sm:$0xf] %vm819, %v1298
        %v1459 = vld [vmem:[%s828 + $0xbc] sm:$0x1]
        %v1460 = vsel %vm831, %v1299, %v1459
        %1461 = vst [vmem:[%s828 + $0xbc] sm:$0x1] %v1460
        %v1462 = vld [vmem:[#allocation2] sm:$0xf]
        %v1463 = vld [vmem:[#allocation2 + $0x4] sm:$0xf]
        %v1464 = vld [vmem:[#allocation2 + $0xc] sm:$0xf]
        %v1465 = vld [vmem:[#allocation2 + $0x10] sm:$0xf]
        %v1466 = vld [vmem:[#allocation2 + $0x18] sm:$0xf]
        %v1467 = vld [vmem:[#allocation2 + $0x1c] sm:$0xf]
        %v1468 = vld [vmem:[#allocation2 + $0x24] sm:$0xf]
        %v1469 = vld [vmem:[#allocation2 + $0x28] sm:$0xf]
        %v1470 = vld [vmem:[#allocation2 + $0x30] sm:$0xf]
        %v1471 = vld [vmem:[#allocation2 + $0x34] sm:$0xf]
        %v1472 = vld [vmem:[#allocation2 + $0x3c] sm:$0xf]
        %v1473 = vld [vmem:[#allocation2 + $0x40] sm:$0xf]
        %v1474 = vld [vmem:[#allocation2 + $0x48] sm:$0xf]
        %v1475 = vld [vmem:[#allocation2 + $0x4c] sm:$0xf]
        %v1476 = vld [vmem:[#allocation2 + $0x54] sm:$0xf]
        %v1477 = vld [vmem:[#allocation2 + $0x58] sm:$0xf]
        %v1478 = vld [vmem:[#allocation2 + $0x60] sm:$0xf]
        %v1479 = vld [vmem:[#allocation2 + $0x64] sm:$0xf]
        %v1480 = vld [vmem:[#allocation2 + $0x6c] sm:$0xf]
        %v1481 = vld [vmem:[#allocation2 + $0x70] sm:$0xf]
        %v1482 = vld [vmem:[#allocation2 + $0x78] sm:$0xf]
        %v1483 = vld [vmem:[#allocation2 + $0x7c] sm:$0xf]
        %v1484 = vld [vmem:[#allocation2 + $0x84] sm:$0xf]
        %v1485 = vld [vmem:[#allocation2 + $0x88] sm:$0xf]
        %v1486 = vld [vmem:[#allocation2 + $0x90] sm:$0xf]
        %v1487 = vld [vmem:[#allocation2 + $0x94] sm:$0xf]
        %v1488 = vld [vmem:[#allocation2 + $0x9c] sm:$0xf]
        %v1489 = vld [vmem:[#allocation2 + $0xa0] sm:$0xf]
        %v1490 = vld [vmem:[#allocation2 + $0xa8] sm:$0xf]
        %v1491 = vld [vmem:[#allocation2 + $0xac] sm:$0xf]
        %v1492 = vld [vmem:[#allocation2 + $0xb4] sm:$0xf]
        %v1493 = vld [vmem:[#allocation2 + $0xb8] sm:$0xf]
        %v1494 = vld [vmem:[#allocation2 + $0xc0] sm:$0xf]
        %v1495 = vld [vmem:[#allocation2 + $0xc4] sm:$0xf]
        %v1496 = vld [vmem:[#allocation2 + $0xcc] sm:$0xf]
        %v1497 = vld [vmem:[#allocation2 + $0xd0] sm:$0xf]
        %v1498 = vld [vmem:[#allocation2 + $0x8] sm:$0x1]
        %v1499 = vld [vmem:[#allocation2 + $0x14] sm:$0x1]
        %v1500 = vld [vmem:[#allocation2 + $0x20] sm:$0x1]
        %v1501 = vld [vmem:[#allocation2 + $0x2c] sm:$0x1]
        %v1502 = vld [vmem:[#allocation2 + $0x38] sm:$0x1]
        %v1503 = vld [vmem:[#allocation2 + $0x44] sm:$0x1]
        %v1504 = vld [vmem:[#allocation2 + $0x50] sm:$0x1]
        %v1505 = vld [vmem:[#allocation2 + $0x5c] sm:$0x1]
        %v1506 = vld [vmem:[#allocation2 + $0x68] sm:$0x1]
        %v1507 = vld [vmem:[#allocation2 + $0x74] sm:$0x1]
        %v1508 = vld [vmem:[#allocation2 + $0x80] sm:$0x1]
        %v1509 = vld [vmem:[#allocation2 + $0x8c] sm:$0x1]
        %v1510 = vld [vmem:[#allocation2 + $0x98] sm:$0x1]
        %v1511 = vld [vmem:[#allocation2 + $0xa4] sm:$0x1]
        %v1512 = vld [vmem:[#allocation2 + $0xb0] sm:$0x1]
        %v1513 = vld [vmem:[#allocation2 + $0xbc] sm:$0x1]
        %v1514 = vld [vmem:[#allocation2 + $0xc8] sm:$0x1]
        %v1515 = vld [vmem:[#allocation2 + $0xd4] sm:$0x1]
        %v1516 = vld [vmem:[#allocation2] sm:$0xe]
        %v1517 = vld [vmem:[#allocation2 + $0xc] sm:$0xe]
        %v1518 = vld [vmem:[#allocation2 + $0x18] sm:$0xe]
        %v1519 = vld [vmem:[#allocation2 + $0x24] sm:$0xe]
        %v1520 = vld [vmem:[#allocation2 + $0x30] sm:$0xe]
        %v1521 = vld [vmem:[#allocation2 + $0x3c] sm:$0xe]
        %v1522 = vld [vmem:[#allocation2 + $0x48] sm:$0xe]
        %v1523 = vld [vmem:[#allocation2 + $0x54] sm:$0xe]
        %v1524 = vld [vmem:[#allocation2 + $0x60] sm:$0xe]
        %v1525 = vld [vmem:[#allocation2 + $0x6c] sm:$0xe]
        %v1526 = vld [vmem:[#allocation2 + $0x78] sm:$0xe]
        %v1527 = vld [vmem:[#allocation2 + $0x84] sm:$0xe]
        %v1528 = vld [vmem:[#allocation2 + $0x90] sm:$0xe]
        %v1529 = vld [vmem:[#allocation2 + $0x9c] sm:$0xe]
        %v1530 = vld [vmem:[#allocation2 + $0xa8] sm:$0xe]
        %v1531 = vld [vmem:[#allocation2 + $0xb4] sm:$0xe]
        %v1532 = vld [vmem:[#allocation2 + $0xc0] sm:$0xe]
        %v1533 = vld [vmem:[#allocation2 + $0xcc] sm:$0xe]
        %v1570 = vunpack.c.l.b16 %v1462
        %v1571 = vunpack.c.l.b16 %v1463
        %v1572 = vunpack.c.l.b16 %v1464
        %v1573 = vunpack.c.l.b16 %v1465
        %v1574 = vunpack.c.l.b16 %v1466
        %v1575 = vunpack.c.l.b16 %v1467
        %v1576 = vunpack.c.l.b16 %v1468
        %v1577 = vunpack.c.l.b16 %v1469
        %v1578 = vunpack.c.l.b16 %v1470
        %v1579 = vunpack.c.l.b16 %v1471
        %v1580 = vunpack.c.l.b16 %v1472
        %v1581 = vunpack.c.l.b16 %v1473
        %v1582 = vunpack.c.l.b16 %v1474
        %v1583 = vunpack.c.l.b16 %v1475
        %v1584 = vunpack.c.l.b16 %v1476
        %v1585 = vunpack.c.l.b16 %v1477
        %v1586 = vunpack.c.l.b16 %v1478
        %v1587 = vunpack.c.l.b16 %v1479
        %v1588 = vunpack.c.l.b16 %v1480
        %v1589 = vunpack.c.l.b16 %v1481
        %v1590 = vunpack.c.l.b16 %v1482
        %v1591 = vunpack.c.l.b16 %v1483
        %v1592 = vunpack.c.l.b16 %v1484
        %v1593 = vunpack.c.l.b16 %v1485
        %v1594 = vunpack.c.l.b16 %v1486
        %v1595 = vunpack.c.l.b16 %v1487
        %v1596 = vunpack.c.l.b16 %v1488
        %v1597 = vunpack.c.l.b16 %v1489
        %v1598 = vunpack.c.l.b16 %v1490
        %v1599 = vunpack.c.l.b16 %v1491
        %v1600 = vunpack.c.l.b16 %v1492
        %v1601 = vunpack.c.l.b16 %v1493
        %v1602 = vunpack.c.l.b16 %v1494
        %v1603 = vunpack.c.l.b16 %v1495
        %v1604 = vunpack.c.l.b16 %v1496
        %v1605 = vunpack.c.l.b16 %v1497
        %v1606 = vpack.c.b16 %v1571, %v1570
        %v1607 = vpack.c.b16 %v1573, %v1572
        %v1608 = vpack.c.b16 %v1575, %v1574
        %v1609 = vpack.c.b16 %v1577, %v1576
        %v1610 = vpack.c.b16 %v1579, %v1578
        %v1611 = vpack.c.b16 %v1581, %v1580
        %v1612 = vpack.c.b16 %v1583, %v1582
        %v1613 = vpack.c.b16 %v1585, %v1584
        %v1614 = vpack.c.b16 %v1587, %v1586
        %v1615 = vpack.c.b16 %v1589, %v1588
        %v1616 = vpack.c.b16 %v1591, %v1590
        %v1617 = vpack.c.b16 %v1593, %v1592
        %v1618 = vpack.c.b16 %v1595, %v1594
        %v1619 = vpack.c.b16 %v1597, %v1596
        %v1620 = vpack.c.b16 %v1599, %v1598
        %v1621 = vpack.c.b16 %v1601, %v1600
        %v1622 = vpack.c.b16 %v1603, %v1602
        %v1623 = vpack.c.b16 %v1605, %v1604
        %v1642 = vunpack.c.l.b16 %v1498
        %v1643 = vunpack.c.l.b16 %v1499
        %v1644 = vunpack.c.l.b16 %v1500
        %v1645 = vunpack.c.l.b16 %v1501
        %v1646 = vunpack.c.l.b16 %v1502
        %v1647 = vunpack.c.l.b16 %v1503
        %v1648 = vunpack.c.l.b16 %v1504
        %v1649 = vunpack.c.l.b16 %v1505
        %v1650 = vunpack.c.l.b16 %v1506
        %v1651 = vunpack.c.l.b16 %v1507
        %v1652 = vunpack.c.l.b16 %v1508
        %v1653 = vunpack.c.l.b16 %v1509
        %v1654 = vunpack.c.l.b16 %v1510
        %v1655 = vunpack.c.l.b16 %v1511
        %v1656 = vunpack.c.l.b16 %v1512
        %v1657 = vunpack.c.l.b16 %v1513
        %v1658 = vunpack.c.l.b16 %v1514
        %v1659 = vunpack.c.l.b16 %v1515
        %v1660 = vpack.c.b16 %v1642, %v1642
        %v1661 = vpack.c.b16 %v1643, %v1643
        %v1662 = vpack.c.b16 %v1644, %v1644
        %v1663 = vpack.c.b16 %v1645, %v1645
        %v1664 = vpack.c.b16 %v1646, %v1646
        %v1665 = vpack.c.b16 %v1647, %v1647
        %v1666 = vpack.c.b16 %v1648, %v1648
        %v1667 = vpack.c.b16 %v1649, %v1649
        %v1668 = vpack.c.b16 %v1650, %v1650
        %v1669 = vpack.c.b16 %v1651, %v1651
        %v1670 = vpack.c.b16 %v1652, %v1652
        %v1671 = vpack.c.b16 %v1653, %v1653
        %v1672 = vpack.c.b16 %v1654, %v1654
        %v1673 = vpack.c.b16 %v1655, %v1655
        %v1674 = vpack.c.b16 %v1656, %v1656
        %v1675 = vpack.c.b16 %v1657, %v1657
        %v1676 = vpack.c.b16 %v1658, %v1658
        %v1677 = vpack.c.b16 %v1659, %v1659
        %vm1678 = vsmask.f32 7424
        %v1680 = vshrl.u32 %v1606, 16
        %v1682 = vshll.u32 %v1606, 16
        %v1684 = vrot.slane %v1682, 1
        %v1685 = vor.u32 %v1680, %v1684
        %v1687 = vshll.u32 %v1660, 16
        %v1689 = vrot.slane %v1687, 1
        %v1690 = vsel %vm1678, %v1685, %v1689
        %v1692 = vshrl.u32 %v1607, 16
        %v1694 = vshll.u32 %v1607, 16
        %v1696 = vrot.slane %v1694, 1
        %v1697 = vor.u32 %v1692, %v1696
        %v1699 = vshll.u32 %v1661, 16
        %v1701 = vrot.slane %v1699, 1
        %v1702 = vsel %vm1678, %v1697, %v1701
        %v1704 = vshrl.u32 %v1608, 16
        %v1706 = vshll.u32 %v1608, 16
        %v1708 = vrot.slane %v1706, 1
        %v1709 = vor.u32 %v1704, %v1708
        %v1711 = vshll.u32 %v1662, 16
        %v1713 = vrot.slane %v1711, 1
        %v1714 = vsel %vm1678, %v1709, %v1713
        %v1716 = vshrl.u32 %v1609, 16
        %v1718 = vshll.u32 %v1609, 16
        %v1720 = vrot.slane %v1718, 1
        %v1721 = vor.u32 %v1716, %v1720
        %v1723 = vshll.u32 %v1663, 16
        %v1725 = vrot.slane %v1723, 1
        %v1726 = vsel %vm1678, %v1721, %v1725
        %v1728 = vshrl.u32 %v1610, 16
        %v1730 = vshll.u32 %v1610, 16
        %v1732 = vrot.slane %v1730, 1
        %v1733 = vor.u32 %v1728, %v1732
        %v1735 = vshll.u32 %v1664, 16
        %v1737 = vrot.slane %v1735, 1
        %v1738 = vsel %vm1678, %v1733, %v1737
        %v1740 = vshrl.u32 %v1611, 16
        %v1742 = vshll.u32 %v1611, 16
        %v1744 = vrot.slane %v1742, 1
        %v1745 = vor.u32 %v1740, %v1744
        %v1747 = vshll.u32 %v1665, 16
        %v1749 = vrot.slane %v1747, 1
        %v1750 = vsel %vm1678, %v1745, %v1749
        %v1752 = vshrl.u32 %v1612, 16
        %v1754 = vshll.u32 %v1612, 16
        %v1756 = vrot.slane %v1754, 1
        %v1757 = vor.u32 %v1752, %v1756
        %v1759 = vshll.u32 %v1666, 16
        %v1761 = vrot.slane %v1759, 1
        %v1762 = vsel %vm1678, %v1757, %v1761
        %v1764 = vshrl.u32 %v1613, 16
        %v1766 = vshll.u32 %v1613, 16
        %v1768 = vrot.slane %v1766, 1
        %v1769 = vor.u32 %v1764, %v1768
        %v1771 = vshll.u32 %v1667, 16
        %v1773 = vrot.slane %v1771, 1
        %v1774 = vsel %vm1678, %v1769, %v1773
        %v1776 = vshrl.u32 %v1614, 16
        %v1778 = vshll.u32 %v1614, 16
        %v1780 = vrot.slane %v1778, 1
        %v1781 = vor.u32 %v1776, %v1780
        %v1783 = vshll.u32 %v1668, 16
        %v1785 = vrot.slane %v1783, 1
        %v1786 = vsel %vm1678, %v1781, %v1785
        %v1788 = vshrl.u32 %v1615, 16
        %v1790 = vshll.u32 %v1615, 16
        %v1792 = vrot.slane %v1790, 1
        %v1793 = vor.u32 %v1788, %v1792
        %v1795 = vshll.u32 %v1669, 16
        %v1797 = vrot.slane %v1795, 1
        %v1798 = vsel %vm1678, %v1793, %v1797
        %v1800 = vshrl.u32 %v1616, 16
        %v1802 = vshll.u32 %v1616, 16
        %v1804 = vrot.slane %v1802, 1
        %v1805 = vor.u32 %v1800, %v1804
        %v1807 = vshll.u32 %v1670, 16
        %v1809 = vrot.slane %v1807, 1
        %v1810 = vsel %vm1678, %v1805, %v1809
        %v1812 = vshrl.u32 %v1617, 16
        %v1814 = vshll.u32 %v1617, 16
        %v1816 = vrot.slane %v1814, 1
        %v1817 = vor.u32 %v1812, %v1816
        %v1819 = vshll.u32 %v1671, 16
        %v1821 = vrot.slane %v1819, 1
        %v1822 = vsel %vm1678, %v1817, %v1821
        %v1824 = vshrl.u32 %v1618, 16
        %v1826 = vshll.u32 %v1618, 16
        %v1828 = vrot.slane %v1826, 1
        %v1829 = vor.u32 %v1824, %v1828
        %v1831 = vshll.u32 %v1672, 16
        %v1833 = vrot.slane %v1831, 1
        %v1834 = vsel %vm1678, %v1829, %v1833
        %v1836 = vshrl.u32 %v1619, 16
        %v1838 = vshll.u32 %v1619, 16
        %v1840 = vrot.slane %v1838, 1
        %v1841 = vor.u32 %v1836, %v1840
        %v1843 = vshll.u32 %v1673, 16
        %v1845 = vrot.slane %v1843, 1
        %v1846 = vsel %vm1678, %v1841, %v1845
        %v1848 = vshrl.u32 %v1620, 16
        %v1850 = vshll.u32 %v1620, 16
        %v1852 = vrot.slane %v1850, 1
        %v1853 = vor.u32 %v1848, %v1852
        %v1855 = vshll.u32 %v1674, 16
        %v1857 = vrot.slane %v1855, 1
        %v1858 = vsel %vm1678, %v1853, %v1857
        %v1860 = vshrl.u32 %v1621, 16
        %v1862 = vshll.u32 %v1621, 16
        %v1864 = vrot.slane %v1862, 1
        %v1865 = vor.u32 %v1860, %v1864
        %v1867 = vshll.u32 %v1675, 16
        %v1869 = vrot.slane %v1867, 1
        %v1870 = vsel %vm1678, %v1865, %v1869
        %v1872 = vshrl.u32 %v1622, 16
        %v1874 = vshll.u32 %v1622, 16
        %v1876 = vrot.slane %v1874, 1
        %v1877 = vor.u32 %v1872, %v1876
        %v1879 = vshll.u32 %v1676, 16
        %v1881 = vrot.slane %v1879, 1
        %v1882 = vsel %vm1678, %v1877, %v1881
        %v1884 = vshrl.u32 %v1623, 16
        %v1886 = vshll.u32 %v1623, 16
        %v1888 = vrot.slane %v1886, 1
        %v1889 = vor.u32 %v1884, %v1888
        %v1891 = vshll.u32 %v1677, 16
        %v1893 = vrot.slane %v1891, 1
        %v1894 = vsel %vm1678, %v1889, %v1893
        %1895 = vrot.lane.b32.xlu0 %v1690, 32
        %v1896 = vpop.permute.xlu0 %1895
        %1897 = vrot.lane.b32.xlu0 %v1702, 32
        %v1898 = vpop.permute.xlu0 %1897
        %1899 = vrot.lane.b32.xlu0 %v1714, 32
        %v1900 = vpop.permute.xlu0 %1899
        %1901 = vrot.lane.b32.xlu0 %v1726, 32
        %v1902 = vpop.permute.xlu0 %1901
        %1903 = vrot.lane.b32.xlu0 %v1738, 32
        %v1904 = vpop.permute.xlu0 %1903
        %1905 = vrot.lane.b32.xlu0 %v1750, 32
        %v1906 = vpop.permute.xlu0 %1905
        %1907 = vrot.lane.b32.xlu0 %v1762, 32
        %v1908 = vpop.permute.xlu0 %1907
        %1909 = vrot.lane.b32.xlu0 %v1774, 32
        %v1910 = vpop.permute.xlu0 %1909
        %1911 = vrot.lane.b32.xlu0 %v1786, 32
        %v1912 = vpop.permute.xlu0 %1911
        %1913 = vrot.lane.b32.xlu0 %v1798, 32
        %v1914 = vpop.permute.xlu0 %1913
        %1915 = vrot.lane.b32.xlu0 %v1810, 32
        %v1916 = vpop.permute.xlu0 %1915
        %1917 = vrot.lane.b32.xlu0 %v1822, 32
        %v1918 = vpop.permute.xlu0 %1917
        %1919 = vrot.lane.b32.xlu0 %v1834, 32
        %v1920 = vpop.permute.xlu0 %1919
        %1921 = vrot.lane.b32.xlu0 %v1846, 32
        %v1922 = vpop.permute.xlu0 %1921
        %1923 = vrot.lane.b32.xlu0 %v1858, 32
        %v1924 = vpop.permute.xlu0 %1923
        %1925 = vrot.lane.b32.xlu0 %v1870, 32
        %v1926 = vpop.permute.xlu0 %1925
        %1927 = vrot.lane.b32.xlu0 %v1882, 32
        %v1928 = vpop.permute.xlu0 %1927
        %1929 = vrot.lane.b32.xlu0 %v1894, 32
        %v1930 = vpop.permute.xlu0 %1929
        %v1949 = vunpack.c.l.b16 %v1516
        %v1950 = vunpack.c.l.b16 %v1517
        %v1951 = vunpack.c.l.b16 %v1518
        %v1952 = vunpack.c.l.b16 %v1519
        %v1953 = vunpack.c.l.b16 %v1520
        %v1954 = vunpack.c.l.b16 %v1521
        %v1955 = vunpack.c.l.b16 %v1522
        %v1956 = vunpack.c.l.b16 %v1523
        %v1957 = vunpack.c.l.b16 %v1524
        %v1958 = vunpack.c.l.b16 %v1525
        %v1959 = vunpack.c.l.b16 %v1526
        %v1960 = vunpack.c.l.b16 %v1527
        %v1961 = vunpack.c.l.b16 %v1528
        %v1962 = vunpack.c.l.b16 %v1529
        %v1963 = vunpack.c.l.b16 %v1530
        %v1964 = vunpack.c.l.b16 %v1531
        %v1965 = vunpack.c.l.b16 %v1532
        %v1966 = vunpack.c.l.b16 %v1533
        %v1967 = vpack.c.b16 %v1571, %v1949
        %v1968 = vpack.c.b16 %v1573, %v1950
        %v1969 = vpack.c.b16 %v1575, %v1951
        %v1970 = vpack.c.b16 %v1577, %v1952
        %v1971 = vpack.c.b16 %v1579, %v1953
        %v1972 = vpack.c.b16 %v1581, %v1954
        %v1973 = vpack.c.b16 %v1583, %v1955
        %v1974 = vpack.c.b16 %v1585, %v1956
        %v1975 = vpack.c.b16 %v1587, %v1957
        %v1976 = vpack.c.b16 %v1589, %v1958
        %v1977 = vpack.c.b16 %v1591, %v1959
        %v1978 = vpack.c.b16 %v1593, %v1960
        %v1979 = vpack.c.b16 %v1595, %v1961
        %v1980 = vpack.c.b16 %v1597, %v1962
        %v1981 = vpack.c.b16 %v1599, %v1963
        %v1982 = vpack.c.b16 %v1601, %v1964
        %v1983 = vpack.c.b16 %v1603, %v1965
        %v1984 = vpack.c.b16 %v1605, %v1966
        %vm1985 = vcmask 1046528
        %v1986 = vrot.slane %v1967, 1
        %v1987 = vrot.slane %v1660, 1
        %v1988 = vsel %vm1985, %v1986, %v1987
        %v1989 = vrot.slane %v1968, 1
        %v1990 = vrot.slane %v1661, 1
        %v1991 = vsel %vm1985, %v1989, %v1990
        %v1992 = vrot.slane %v1969, 1
        %v1993 = vrot.slane %v1662, 1
        %v1994 = vsel %vm1985, %v1992, %v1993
        %v1995 = vrot.slane %v1970, 1
        %v1996 = vrot.slane %v1663, 1
        %v1997 = vsel %vm1985, %v1995, %v1996
        %v1998 = vrot.slane %v1971, 1
        %v1999 = vrot.slane %v1664, 1
        %v2000 = vsel %vm1985, %v1998, %v1999
        %v2001 = vrot.slane %v1972, 1
        %v2002 = vrot.slane %v1665, 1
        %v2003 = vsel %vm1985, %v2001, %v2002
        %v2004 = vrot.slane %v1973, 1
        %v2005 = vrot.slane %v1666, 1
        %v2006 = vsel %vm1985, %v2004, %v2005
        %v2007 = vrot.slane %v1974, 1
        %v2008 = vrot.slane %v1667, 1
        %v2009 = vsel %vm1985, %v2007, %v2008
        %v2010 = vrot.slane %v1975, 1
        %v2011 = vrot.slane %v1668, 1
        %v2012 = vsel %vm1985, %v2010, %v2011
        %v2013 = vrot.slane %v1976, 1
        %v2014 = vrot.slane %v1669, 1
        %v2015 = vsel %vm1985, %v2013, %v2014
        %v2016 = vrot.slane %v1977, 1
        %v2017 = vrot.slane %v1670, 1
        %v2018 = vsel %vm1985, %v2016, %v2017
        %v2019 = vrot.slane %v1978, 1
        %v2020 = vrot.slane %v1671, 1
        %v2021 = vsel %vm1985, %v2019, %v2020
        %v2022 = vrot.slane %v1979, 1
        %v2023 = vrot.slane %v1672, 1
        %v2024 = vsel %vm1985, %v2022, %v2023
        %v2025 = vrot.slane %v1980, 1
        %v2026 = vrot.slane %v1673, 1
        %v2027 = vsel %vm1985, %v2025, %v2026
        %v2028 = vrot.slane %v1981, 1
        %v2029 = vrot.slane %v1674, 1
        %v2030 = vsel %vm1985, %v2028, %v2029
        %v2031 = vrot.slane %v1982, 1
        %v2032 = vrot.slane %v1675, 1
        %v2033 = vsel %vm1985, %v2031, %v2032
        %v2034 = vrot.slane %v1983, 1
        %v2035 = vrot.slane %v1676, 1
        %v2036 = vsel %vm1985, %v2034, %v2035
        %v2037 = vrot.slane %v1984, 1
        %v2038 = vrot.slane %v1677, 1
        %v2039 = vsel %vm1985, %v2037, %v2038
        %2040 = vrot.lane.b32.xlu0 %v1988, 64
        %v2041 = vpop.permute.xlu0 %2040
        %2042 = vrot.lane.b32.xlu0 %v1991, 64
        %v2043 = vpop.permute.xlu0 %2042
        %2044 = vrot.lane.b32.xlu0 %v1994, 64
        %v2045 = vpop.permute.xlu0 %2044
        %2046 = vrot.lane.b32.xlu0 %v1997, 64
        %v2047 = vpop.permute.xlu0 %2046
        %2048 = vrot.lane.b32.xlu0 %v2000, 64
        %v2049 = vpop.permute.xlu0 %2048
        %2050 = vrot.lane.b32.xlu0 %v2003, 64
        %v2051 = vpop.permute.xlu0 %2050
        %2052 = vrot.lane.b32.xlu0 %v2006, 64
        %v2053 = vpop.permute.xlu0 %2052
        %2054 = vrot.lane.b32.xlu0 %v2009, 64
        %v2055 = vpop.permute.xlu0 %2054
        %2056 = vrot.lane.b32.xlu0 %v2012, 64
        %v2057 = vpop.permute.xlu0 %2056
        %2058 = vrot.lane.b32.xlu0 %v2015, 64
        %v2059 = vpop.permute.xlu0 %2058
        %2060 = vrot.lane.b32.xlu0 %v2018, 64
        %v2061 = vpop.permute.xlu0 %2060
        %2062 = vrot.lane.b32.xlu0 %v2021, 64
        %v2063 = vpop.permute.xlu0 %2062
        %2064 = vrot.lane.b32.xlu0 %v2024, 64
        %v2065 = vpop.permute.xlu0 %2064
        %2066 = vrot.lane.b32.xlu0 %v2027, 64
        %v2067 = vpop.permute.xlu0 %2066
        %2068 = vrot.lane.b32.xlu0 %v2030, 64
        %v2069 = vpop.permute.xlu0 %2068
        %2070 = vrot.lane.b32.xlu0 %v2033, 64
        %v2071 = vpop.permute.xlu0 %2070
        %2072 = vrot.lane.b32.xlu0 %v2036, 64
        %v2073 = vpop.permute.xlu0 %2072
        %2074 = vrot.lane.b32.xlu0 %v2039, 64
        %v2075 = vpop.permute.xlu0 %2074
        %vm2076 = vcmask 261120
        %v2078 = vsel %vm2076, %v1606, %v1896
        %v2080 = vsel %vm2076, %v1607, %v1898
        %v2082 = vsel %vm2076, %v1608, %v1900
        %v2084 = vsel %vm2076, %v1609, %v1902
        %v2086 = vsel %vm2076, %v1610, %v1904
        %v2088 = vsel %vm2076, %v1611, %v1906
        %v2090 = vsel %vm2076, %v1612, %v1908
        %v2092 = vsel %vm2076, %v1613, %v1910
        %v2094 = vsel %vm2076, %v1614, %v1912
        %v2096 = vsel %vm2076, %v1615, %v1914
        %v2098 = vsel %vm2076, %v1616, %v1916
        %v2100 = vsel %vm2076, %v1617, %v1918
        %v2102 = vsel %vm2076, %v1618, %v1920
        %v2104 = vsel %vm2076, %v1619, %v1922
        %v2106 = vsel %vm2076, %v1620, %v1924
        %v2108 = vsel %vm2076, %v1621, %v1926
        %v2110 = vsel %vm2076, %v1622, %v1928
        %v2112 = vsel %vm2076, %v1623, %v1930
        %v2114 = vsel %vm385, %v2078, %v2041
        %v2116 = vsel %vm385, %v2080, %v2043
        %v2118 = vsel %vm385, %v2082, %v2045
        %v2120 = vsel %vm385, %v2084, %v2047
        %v2122 = vsel %vm385, %v2086, %v2049
        %v2124 = vsel %vm385, %v2088, %v2051
        %v2126 = vsel %vm385, %v2090, %v2053
        %v2128 = vsel %vm385, %v2092, %v2055
        %v2130 = vsel %vm385, %v2094, %v2057
        %v2132 = vsel %vm385, %v2096, %v2059
        %v2134 = vsel %vm385, %v2098, %v2061
        %v2136 = vsel %vm385, %v2100, %v2063
        %v2138 = vsel %vm385, %v2102, %v2065
        %v2140 = vsel %vm385, %v2104, %v2067
        %v2142 = vsel %vm385, %v2106, %v2069
        %v2144 = vsel %vm385, %v2108, %v2071
        %v2146 = vsel %vm385, %v2110, %v2073
        %v2148 = vsel %vm385, %v2112, %v2075
        %v2149 = vld [vmem:[#allocation9] sm:$0xf]
        %v2150 = vld [vmem:[#allocation9 + $0x4] sm:$0xf]
        %v2151 = vld [vmem:[#allocation9 + $0x8] sm:$0xf]
        %v2152 = vld [vmem:[#allocation9 + $0xc] sm:$0xf]
        %v2153 = vld [vmem:[#allocation9 + $0x10] sm:$0xf]
        %v2154 = vld [vmem:[#allocation9 + $0x14] sm:$0xf]
        %v2155 = vld [vmem:[#allocation9 + $0x18] sm:$0xf]
        %v2156 = vld [vmem:[#allocation9 + $0x1c] sm:$0xf]
        %v2157 = vld [vmem:[#allocation9 + $0x20] sm:$0xf]
        %v2158 = vld [vmem:[#allocation9 + $0x24] sm:$0xf]
        %v2159 = vld [vmem:[#allocation9 + $0x28] sm:$0xf]
        %v2160 = vld [vmem:[#allocation9 + $0x2c] sm:$0xf]
        %s2161 = scalar_lea.vmem [#allocation9], 48
        %v2162 = vld [vmem:[%s2161] sm:$0xf]
        %v2163 = vld [vmem:[%s2161 + $0x4] sm:$0xf]
        %v2164 = vld [vmem:[%s2161 + $0x8] sm:$0xf]
        %v2165 = vld [vmem:[%s2161 + $0xc] sm:$0xf]
        %v2166 = vld [vmem:[%s2161 + $0x10] sm:$0xf]
        %v2167 = vld [vmem:[%s2161 + $0x14] sm:$0xf]
        %v2168 = vld [vmem:[%s2161 + $0x18] sm:$0xf]
        %v2169 = vld [vmem:[%s2161 + $0x1c] sm:$0xf]
        %v2170 = vld [vmem:[%s2161 + $0x20] sm:$0xf]
        %v2171 = vld [vmem:[%s2161 + $0x24] sm:$0xf]
        %v2172 = vld [vmem:[%s2161 + $0x28] sm:$0xf]
        %v2173 = vld [vmem:[%s2161 + $0x2c] sm:$0xf]
        %v2186 = vunpack.c.l.b16 %v2162
        %v2187 = vunpack.c.l.b16 %v2163
        %v2188 = vunpack.c.l.b16 %v2164
        %v2189 = vunpack.c.l.b16 %v2165
        %v2190 = vunpack.c.l.b16 %v2166
        %v2191 = vunpack.c.l.b16 %v2167
        %v2192 = vunpack.c.l.b16 %v2168
        %v2193 = vunpack.c.l.b16 %v2169
        %v2194 = vunpack.c.l.b16 %v2170
        %v2195 = vunpack.c.l.b16 %v2171
        %v2196 = vunpack.c.l.b16 %v2172
        %v2197 = vunpack.c.l.b16 %v2173
        %v2198 = vpack.c.b16 %v2187, %v2186
        %v2199 = vpack.c.b16 %v2189, %v2188
        %v2200 = vpack.c.b16 %v2191, %v2190
        %v2201 = vpack.c.b16 %v2193, %v2192
        %v2202 = vpack.c.b16 %v2195, %v2194
        %v2203 = vpack.c.b16 %v2197, %v2196
        %vm2210 = vcmask 785408
        %v2211 = vsel %vm2210, %v2116, 0
        %v2213 = vsel %vm2210, %v2118, 0
        %v2215 = vsel %vm2210, %v2120, 0
        %v2217 = vsel %vm2210, %v2122, 0
        %v2219 = vsel %vm2210, %v2124, 0
        %v2221 = vsel %vm2210, %v2126, 0
        %v2223 = vsel %vm2210, %v2128, 0
        %v2225 = vsel %vm2210, %v2130, 0
        %v2227 = vsel %vm2210, %v2132, 0
        %v2229 = vsel %vm2210, %v2134, 0
        %v2231 = vsel %vm2210, %v2136, 0
        %v2233 = vsel %vm2210, %v2138, 0
        %v2235 = vsel %vm2210, %v2140, 0
        %v2237 = vsel %vm2210, %v2142, 0
        %v2239 = vsel %vm2210, %v2144, 0
        %v2241 = vsel %vm2210, %v2146, 0
        %2243 = vmatprep.subr.bf16.mxu0 0
        %2244 = vmatpush1.bf16.msra.mxu0 %v2198
        %2245 = vmatprep.subr.bf16.mxu0 0
        %2246 = vmatpush1.bf16.msra.mxu0 %v2199
        %2247 = vmatprep.subr.bf16.mxu0 0
        %2248 = vmatpush1.bf16.msra.mxu0 %v2200
        %2249 = vmatprep.subr.bf16.mxu0 0
        %2250 = vmatpush1.bf16.msra.mxu0 %v2201
        %2251 = vmatprep.subr.bf16.mxu0 0
        %2252 = vmatpush1.bf16.msra.mxu0 %v2202
        %2253 = vmatprep.subr.bf16.mxu0 0
        %2254 = vmatpush1.bf16.msra.mxu0 %v2203
        %2255 = vmatprep.subr.bf16.mxu0 0
        %2256 = vmatpush1.bf16.msra.mxu0 0
        %2257 = vmatprep.subr.bf16.mxu0 0
        %2258 = vmatpush1.bf16.msra.mxu0 0
        %2259 = vmatprep.subr.bf16.mxu0 0
        %2260 = vmatpush1.bf16.msra.mxu0 0
        %2261 = vmatprep.subr.bf16.mxu0 0
        %2262 = vmatpush1.bf16.msra.mxu0 0
        %2263 = vmatprep.subr.bf16.mxu0 0
        %2264 = vmatpush1.bf16.msra.mxu0 0
        %2265 = vmatprep.subr.bf16.mxu0 0
        %2266 = vmatpush1.bf16.msra.mxu0 0
        %2267 = vmatprep.subr.bf16.mxu0 0
        %2268 = vmatpush1.bf16.msra.mxu0 0
        %2269 = vmatprep.subr.bf16.mxu0 0
        %2270 = vmatpush1.bf16.msra.mxu0 0
        %2271 = vmatprep.subr.bf16.mxu0 0
        %2272 = vmatpush1.bf16.msra.mxu0 0
        %2273 = vmatprep.subr.bf16.mxu0 0
        %2274 = vmatpush1.bf16.msra.mxu0 0
        %2275 = vmatprep.mubr.bf16.mxu0 0
        %2276 = vmatmul.mubr.bf16.gmra.mrb[0].mxu0 %v2211
        %v2277 = vpop.f32.mrb[0].mxu0
        %v2278 = vadd.f32 0.0, %v2277
        %v2279 = vpop.f32.mrb[0].mxu0
        %v2280 = vpop.f32.mrb[0].mxu0
        %v2281 = vadd.f32 0.0, %v2280
        %v2282 = vpop.f32.mrb[0].mxu0
        %2283 = vmatprep.mubr.bf16.mxu0 0
        %2284 = vmatmul.mubr.bf16.gmra.mrb[0].mxu0 %v2213
        %v2285 = vpop.f32.mrb[0].mxu0
        %v2286 = vadd.f32 0.0, %v2285
        %v2287 = vpop.f32.mrb[0].mxu0
        %v2288 = vpop.f32.mrb[0].mxu0
        %v2289 = vadd.f32 0.0, %v2288
        %v2290 = vpop.f32.mrb[0].mxu0
        %2291 = vmatprep.mubr.bf16.mxu0 0
        %2292 = vmatmul.mubr.bf16.gmra.mrb[0].mxu0 %v2215
        %v2293 = vpop.f32.mrb[0].mxu0
        %v2294 = vadd.f32 0.0, %v2293
        %v2295 = vpop.f32.mrb[0].mxu0
        %v2296 = vpop.f32.mrb[0].mxu0
        %v2297 = vadd.f32 0.0, %v2296
        %v2298 = vpop.f32.mrb[0].mxu0
        %2299 = vmatprep.mubr.bf16.mxu0 0
        %2300 = vmatmul.mubr.bf16.gmra.mrb[0].mxu0 %v2217
        %v2301 = vpop.f32.mrb[0].mxu0
        %v2302 = vadd.f32 0.0, %v2301
        %v2303 = vpop.f32.mrb[0].mxu0
        %v2304 = vpop.f32.mrb[0].mxu0
        %v2305 = vadd.f32 0.0, %v2304
        %v2306 = vpop.f32.mrb[0].mxu0
        %2307 = vmatprep.mubr.bf16.mxu0 0
        %2308 = vmatmul.mubr.bf16.gmra.mrb[0].mxu0 %v2219
        %v2309 = vpop.f32.mrb[0].mxu0
        %v2310 = vadd.f32 0.0, %v2309
        %v2311 = vpop.f32.mrb[0].mxu0
        %v2312 = vpop.f32.mrb[0].mxu0
        %v2313 = vadd.f32 0.0, %v2312
        %v2314 = vpop.f32.mrb[0].mxu0
        %2315 = vmatprep.mubr.bf16.mxu0 0
        %2316 = vmatmul.mubr.bf16.gmra.mrb[0].mxu0 %v2221
        %v2317 = vpop.f32.mrb[0].mxu0
        %v2318 = vadd.f32 0.0, %v2317
        %v2319 = vpop.f32.mrb[0].mxu0
        %v2320 = vpop.f32.mrb[0].mxu0
        %v2321 = vadd.f32 0.0, %v2320
        %v2322 = vpop.f32.mrb[0].mxu0
        %2323 = vmatprep.mubr.bf16.mxu0 0
        %2324 = vmatmul.mubr.bf16.gmra.mrb[0].mxu0 %v2223
        %v2325 = vpop.f32.mrb[0].mxu0
        %v2326 = vadd.f32 0.0, %v2325
        %v2327 = vpop.f32.mrb[0].mxu0
        %v2328 = vpop.f32.mrb[0].mxu0
        %v2329 = vadd.f32 0.0, %v2328
        %v2330 = vpop.f32.mrb[0].mxu0
        %2331 = vmatprep.mubr.bf16.mxu0 0
        %2332 = vmatmul.mubr.bf16.gmra.mrb[0].mxu0 %v2225
        %v2333 = vpop.f32.mrb[0].mxu0
        %v2334 = vadd.f32 0.0, %v2333
        %v2335 = vpop.f32.mrb[0].mxu0
        %v2336 = vpop.f32.mrb[0].mxu0
        %v2337 = vadd.f32 0.0, %v2336
        %v2338 = vpop.f32.mrb[0].mxu0
        %2339 = vmatprep.mubr.bf16.mxu0 0
        %2340 = vmatmul.mubr.bf16.gmra.mrb[0].mxu0 %v2227
        %v2341 = vpop.f32.mrb[0].mxu0
        %v2342 = vadd.f32 0.0, %v2341
        %v2343 = vpop.f32.mrb[0].mxu0
        %v2344 = vpop.f32.mrb[0].mxu0
        %v2345 = vadd.f32 0.0, %v2344
        %v2346 = vpop.f32.mrb[0].mxu0
        %2347 = vmatprep.mubr.bf16.mxu0 0
        %2348 = vmatmul.mubr.bf16.gmra.mrb[0].mxu0 %v2229
        %v2349 = vpop.f32.mrb[0].mxu0
        %v2350 = vadd.f32 0.0, %v2349
        %v2351 = vpop.f32.mrb[0].mxu0
        %v2352 = vpop.f32.mrb[0].mxu0
        %v2353 = vadd.f32 0.0, %v2352
        %v2354 = vpop.f32.mrb[0].mxu0
        %2355 = vmatprep.mubr.bf16.mxu0 0
        %2356 = vmatmul.mubr.bf16.gmra.mrb[0].mxu0 %v2231
        %v2357 = vpop.f32.mrb[0].mxu0
        %v2358 = vadd.f32 0.0, %v2357
        %v2359 = vpop.f32.mrb[0].mxu0
        %v2360 = vpop.f32.mrb[0].mxu0
        %v2361 = vadd.f32 0.0, %v2360
        %v2362 = vpop.f32.mrb[0].mxu0
        %2363 = vmatprep.mubr.bf16.mxu0 0
        %2364 = vmatmul.mubr.bf16.gmra.mrb[0].mxu0 %v2233
        %v2365 = vpop.f32.mrb[0].mxu0
        %v2366 = vadd.f32 0.0, %v2365
        %v2367 = vpop.f32.mrb[0].mxu0
        %v2368 = vpop.f32.mrb[0].mxu0
        %v2369 = vadd.f32 0.0, %v2368
        %v2370 = vpop.f32.mrb[0].mxu0
        %2371 = vmatprep.mubr.bf16.mxu0 0
        %2372 = vmatmul.mubr.bf16.gmra.mrb[0].mxu0 %v2235
        %v2373 = vpop.f32.mrb[0].mxu0
        %v2374 = vadd.f32 0.0, %v2373
        %v2375 = vpop.f32.mrb[0].mxu0
        %v2376 = vpop.f32.mrb[0].mxu0
        %v2377 = vadd.f32 0.0, %v2376
        %v2378 = vpop.f32.mrb[0].mxu0
        %2379 = vmatprep.mubr.bf16.mxu0 0
        %2380 = vmatmul.mubr.bf16.gmra.mrb[0].mxu0 %v2237
        %v2381 = vpop.f32.mrb[0].mxu0
        %v2382 = vadd.f32 0.0, %v2381
        %v2383 = vpop.f32.mrb[0].mxu0
        %v2384 = vpop.f32.mrb[0].mxu0
        %v2385 = vadd.f32 0.0, %v2384
        %v2386 = vpop.f32.mrb[0].mxu0
        %2387 = vmatprep.mubr.bf16.mxu0 0
        %2388 = vmatmul.mubr.bf16.gmra.mrb[0].mxu0 %v2239
        %v2389 = vpop.f32.mrb[0].mxu0
        %v2390 = vadd.f32 0.0, %v2389
        %v2391 = vpop.f32.mrb[0].mxu0
        %v2392 = vpop.f32.mrb[0].mxu0
        %v2393 = vadd.f32 0.0, %v2392
        %v2394 = vpop.f32.mrb[0].mxu0
        %2395 = vmatprep.mubr.bf16.mxu0 0
        %2396 = vmatmul.mubr.bf16.gmra.mrb[0].mxu0 %v2241
        %v2397 = vpop.f32.mrb[0].mxu0
        %v2398 = vadd.f32 0.0, %v2397
        %v2399 = vpop.f32.mrb[0].mxu0
        %v2400 = vpop.f32.mrb[0].mxu0
        %v2401 = vadd.f32 0.0, %v2400
        %v2402 = vpop.f32.mrb[0].mxu0
        %2403 = vdwg.mxu0
        %v2416 = vunpack.c.l.b16 %v2149
        %v2417 = vunpack.c.l.b16 %v2150
        %v2418 = vunpack.c.l.b16 %v2151
        %v2419 = vunpack.c.l.b16 %v2152
        %v2420 = vunpack.c.l.b16 %v2153
        %v2421 = vunpack.c.l.b16 %v2154
        %v2422 = vunpack.c.l.b16 %v2155
        %v2423 = vunpack.c.l.b16 %v2156
        %v2424 = vunpack.c.l.b16 %v2157
        %v2425 = vunpack.c.l.b16 %v2158
        %v2426 = vunpack.c.l.b16 %v2159
        %v2427 = vunpack.c.l.b16 %v2160
        %v2428 = vpack.c.b16 %v2417, %v2416
        %v2429 = vpack.c.b16 %v2419, %v2418
        %v2430 = vpack.c.b16 %v2421, %v2420
        %v2431 = vpack.c.b16 %v2423, %v2422
        %v2432 = vpack.c.b16 %v2425, %v2424
        %v2433 = vpack.c.b16 %v2427, %v2426
        %v2440 = vsel %vm2210, %v2114, 0
        %2442 = vmatprep.subr.bf16.mxu0 0
        %2443 = vmatpush1.bf16.msra.mxu0 %v2428
        %2444 = vmatprep.subr.bf16.mxu0 0
        %2445 = vmatpush1.bf16.msra.mxu0 %v2429
        %2446 = vmatprep.subr.bf16.mxu0 0
        %2447 = vmatpush1.bf16.msra.mxu0 %v2430
        %2448 = vmatprep.subr.bf16.mxu0 0
        %2449 = vmatpush1.bf16.msra.mxu0 %v2431
        %2450 = vmatprep.subr.bf16.mxu0 0
        %2451 = vmatpush1.bf16.msra.mxu0 %v2432
        %2452 = vmatprep.subr.bf16.mxu0 0
        %2453 = vmatpush1.bf16.msra.mxu0 %v2433
        %2454 = vmatprep.subr.bf16.mxu0 0
        %2455 = vmatpush1.bf16.msra.mxu0 0
        %2456 = vmatprep.subr.bf16.mxu0 0
        %2457 = vmatpush1.bf16.msra.mxu0 0
        %2458 = vmatprep.subr.bf16.mxu0 0
        %2459 = vmatpush1.bf16.msra.mxu0 0
        %2460 = vmatprep.subr.bf16.mxu0 0
        %2461 = vmatpush1.bf16.msra.mxu0 0
        %2462 = vmatprep.subr.bf16.mxu0 0
        %2463 = vmatpush1.bf16.msra.mxu0 0
        %2464 = vmatprep.subr.bf16.mxu0 0
        %2465 = vmatpush1.bf16.msra.mxu0 0
        %2466 = vmatprep.subr.bf16.mxu0 0
        %2467 = vmatpush1.bf16.msra.mxu0 0
        %2468 = vmatprep.subr.bf16.mxu0 0
        %2469 = vmatpush1.bf16.msra.mxu0 0
        %2470 = vmatprep.subr.bf16.mxu0 0
        %2471 = vmatpush1.bf16.msra.mxu0 0
        %2472 = vmatprep.subr.bf16.mxu0 0
        %2473 = vmatpush1.bf16.msra.mxu0 0
        %2474 = vmatprep.mubr.bf16.mxu0 0
        %2475 = vmatmul.mubr.bf16.gmra.mrb[0].mxu0 %v2440
        %v2476 = vpop.f32.mrb[0].mxu0
        %v2477 = vadd.f32 %v2278, %v2476
        %v2478 = vpop.f32.mrb[0].mxu0
        %v2479 = vpop.f32.mrb[0].mxu0
        %v2480 = vadd.f32 %v2281, %v2479
        %v2481 = vpop.f32.mrb[0].mxu0
        %2482 = vmatprep.mubr.bf16.mxu0 0
        %2483 = vmatmul.mubr.bf16.gmra.mrb[0].mxu0 %v2211
        %v2484 = vpop.f32.mrb[0].mxu0
        %v2485 = vadd.f32 %v2286, %v2484
        %v2486 = vpop.f32.mrb[0].mxu0
        %v2487 = vpop.f32.mrb[0].mxu0
        %v2488 = vadd.f32 %v2289, %v2487
        %v2489 = vpop.f32.mrb[0].mxu0
        %2490 = vmatprep.mubr.bf16.mxu0 0
        %2491 = vmatmul.mubr.bf16.gmra.mrb[0].mxu0 %v2213
        %v2492 = vpop.f32.mrb[0].mxu0
        %v2493 = vadd.f32 %v2294, %v2492
        %v2494 = vpop.f32.mrb[0].mxu0
        %v2495 = vpop.f32.mrb[0].mxu0
        %v2496 = vadd.f32 %v2297, %v2495
        %v2497 = vpop.f32.mrb[0].mxu0
        %2498 = vmatprep.mubr.bf16.mxu0 0
        %2499 = vmatmul.mubr.bf16.gmra.mrb[0].mxu0 %v2215
        %v2500 = vpop.f32.mrb[0].mxu0
        %v2501 = vadd.f32 %v2302, %v2500
        %v2502 = vpop.f32.mrb[0].mxu0
        %v2503 = vpop.f32.mrb[0].mxu0
        %v2504 = vadd.f32 %v2305, %v2503
        %v2505 = vpop.f32.mrb[0].mxu0
        %2506 = vmatprep.mubr.bf16.mxu0 0
        %2507 = vmatmul.mubr.bf16.gmra.mrb[0].mxu0 %v2217
        %v2508 = vpop.f32.mrb[0].mxu0
        %v2509 = vadd.f32 %v2310, %v2508
        %v2510 = vpop.f32.mrb[0].mxu0
        %v2511 = vpop.f32.mrb[0].mxu0
        %v2512 = vadd.f32 %v2313, %v2511
        %v2513 = vpop.f32.mrb[0].mxu0
        %2514 = vmatprep.mubr.bf16.mxu0 0
        %2515 = vmatmul.mubr.bf16.gmra.mrb[0].mxu0 %v2219
        %v2516 = vpop.f32.mrb[0].mxu0
        %v2517 = vadd.f32 %v2318, %v2516
        %v2518 = vpop.f32.mrb[0].mxu0
        %v2519 = vpop.f32.mrb[0].mxu0
        %v2520 = vadd.f32 %v2321, %v2519
        %v2521 = vpop.f32.mrb[0].mxu0
        %2522 = vmatprep.mubr.bf16.mxu0 0
        %2523 = vmatmul.mubr.bf16.gmra.mrb[0].mxu0 %v2221
        %v2524 = vpop.f32.mrb[0].mxu0
        %v2525 = vadd.f32 %v2326, %v2524
        %v2526 = vpop.f32.mrb[0].mxu0
        %v2527 = vpop.f32.mrb[0].mxu0
        %v2528 = vadd.f32 %v2329, %v2527
        %v2529 = vpop.f32.mrb[0].mxu0
        %2530 = vmatprep.mubr.bf16.mxu0 0
        %2531 = vmatmul.mubr.bf16.gmra.mrb[0].mxu0 %v2223
        %v2532 = vpop.f32.mrb[0].mxu0
        %v2533 = vadd.f32 %v2334, %v2532
        %v2534 = vpop.f32.mrb[0].mxu0
        %v2535 = vpop.f32.mrb[0].mxu0
        %v2536 = vadd.f32 %v2337, %v2535
        %v2537 = vpop.f32.mrb[0].mxu0
        %2538 = vmatprep.mubr.bf16.mxu0 0
        %2539 = vmatmul.mubr.bf16.gmra.mrb[0].mxu0 %v2225
        %v2540 = vpop.f32.mrb[0].mxu0
        %v2541 = vadd.f32 %v2342, %v2540
        %v2542 = vpop.f32.mrb[0].mxu0
        %v2543 = vpop.f32.mrb[0].mxu0
        %v2544 = vadd.f32 %v2345, %v2543
        %v2545 = vpop.f32.mrb[0].mxu0
        %2546 = vmatprep.mubr.bf16.mxu0 0
        %2547 = vmatmul.mubr.bf16.gmra.mrb[0].mxu0 %v2227
        %v2548 = vpop.f32.mrb[0].mxu0
        %v2549 = vadd.f32 %v2350, %v2548
        %v2550 = vpop.f32.mrb[0].mxu0
        %v2551 = vpop.f32.mrb[0].mxu0
        %v2552 = vadd.f32 %v2353, %v2551
        %v2553 = vpop.f32.mrb[0].mxu0
        %2554 = vmatprep.mubr.bf16.mxu0 0
        %2555 = vmatmul.mubr.bf16.gmra.mrb[0].mxu0 %v2229
        %v2556 = vpop.f32.mrb[0].mxu0
        %v2557 = vadd.f32 %v2358, %v2556
        %v2558 = vpop.f32.mrb[0].mxu0
        %v2559 = vpop.f32.mrb[0].mxu0
        %v2560 = vadd.f32 %v2361, %v2559
        %v2561 = vpop.f32.mrb[0].mxu0
        %2562 = vmatprep.mubr.bf16.mxu0 0
        %2563 = vmatmul.mubr.bf16.gmra.mrb[0].mxu0 %v2231
        %v2564 = vpop.f32.mrb[0].mxu0
        %v2565 = vadd.f32 %v2366, %v2564
        %v2566 = vpop.f32.mrb[0].mxu0
        %v2567 = vpop.f32.mrb[0].mxu0
        %v2568 = vadd.f32 %v2369, %v2567
        %v2569 = vpop.f32.mrb[0].mxu0
        %2570 = vmatprep.mubr.bf16.mxu0 0
        %2571 = vmatmul.mubr.bf16.gmra.mrb[0].mxu0 %v2233
        %v2572 = vpop.f32.mrb[0].mxu0
        %v2573 = vadd.f32 %v2374, %v2572
        %v2574 = vpop.f32.mrb[0].mxu0
        %v2575 = vpop.f32.mrb[0].mxu0
        %v2576 = vadd.f32 %v2377, %v2575
        %v2577 = vpop.f32.mrb[0].mxu0
        %2578 = vmatprep.mubr.bf16.mxu0 0
        %2579 = vmatmul.mubr.bf16.gmra.mrb[0].mxu0 %v2235
        %v2580 = vpop.f32.mrb[0].mxu0
        %v2581 = vadd.f32 %v2382, %v2580
        %v2582 = vpop.f32.mrb[0].mxu0
        %v2583 = vpop.f32.mrb[0].mxu0
        %v2584 = vadd.f32 %v2385, %v2583
        %v2585 = vpop.f32.mrb[0].mxu0
        %2586 = vmatprep.mubr.bf16.mxu0 0
        %2587 = vmatmul.mubr.bf16.gmra.mrb[0].mxu0 %v2237
        %v2588 = vpop.f32.mrb[0].mxu0
        %v2589 = vadd.f32 %v2390, %v2588
        %v2590 = vpop.f32.mrb[0].mxu0
        %v2591 = vpop.f32.mrb[0].mxu0
        %v2592 = vadd.f32 %v2393, %v2591
        %v2593 = vpop.f32.mrb[0].mxu0
        %2594 = vmatprep.mubr.bf16.mxu0 0
        %2595 = vmatmul.mubr.bf16.gmra.mrb[0].mxu0 %v2239
        %v2596 = vpop.f32.mrb[0].mxu0
        %v2597 = vadd.f32 %v2398, %v2596
        %v2598 = vpop.f32.mrb[0].mxu0
        %v2599 = vpop.f32.mrb[0].mxu0
        %v2600 = vadd.f32 %v2401, %v2599
        %v2601 = vpop.f32.mrb[0].mxu0
        %2602 = vdwg.mxu0
        %s2603 = scalar_lea.vmem [#allocation9], 96
        %v2604 = vld [vmem:[%s2603] sm:$0xf]
        %v2605 = vld [vmem:[%s2603 + $0x4] sm:$0xf]
        %v2606 = vld [vmem:[%s2603 + $0x8] sm:$0xf]
        %v2607 = vld [vmem:[%s2603 + $0xc] sm:$0xf]
        %v2608 = vld [vmem:[%s2603 + $0x10] sm:$0xf]
        %v2609 = vld [vmem:[%s2603 + $0x14] sm:$0xf]
        %v2610 = vld [vmem:[%s2603 + $0x18] sm:$0xf]
        %v2611 = vld [vmem:[%s2603 + $0x1c] sm:$0xf]
        %v2612 = vld [vmem:[%s2603 + $0x20] sm:$0xf]
        %v2613 = vld [vmem:[%s2603 + $0x24] sm:$0xf]
        %v2614 = vld [vmem:[%s2603 + $0x28] sm:$0xf]
        %v2615 = vld [vmem:[%s2603 + $0x2c] sm:$0xf]
        %v2628 = vunpack.c.l.b16 %v2604
        %v2629 = vunpack.c.l.b16 %v2605
        %v2630 = vunpack.c.l.b16 %v2606
        %v2631 = vunpack.c.l.b16 %v2607
        %v2632 = vunpack.c.l.b16 %v2608
        %v2633 = vunpack.c.l.b16 %v2609
        %v2634 = vunpack.c.l.b16 %v2610
        %v2635 = vunpack.c.l.b16 %v2611
        %v2636 = vunpack.c.l.b16 %v2612
        %v2637 = vunpack.c.l.b16 %v2613
        %v2638 = vunpack.c.l.b16 %v2614
        %v2639 = vunpack.c.l.b16 %v2615
        %v2640 = vpack.c.b16 %v2629, %v2628
        %v2641 = vpack.c.b16 %v2631, %v2630
        %v2642 = vpack.c.b16 %v2633, %v2632
        %v2643 = vpack.c.b16 %v2635, %v2634
        %v2644 = vpack.c.b16 %v2637, %v2636
        %v2645 = vpack.c.b16 %v2639, %v2638
        %v2652 = vsel %vm2210, %v2148, 0
        %2654 = vmatprep.subr.bf16.mxu0 0
        %2655 = vmatpush1.bf16.msra.mxu0 %v2640
        %2656 = vmatprep.subr.bf16.mxu0 0
        %2657 = vmatpush1.bf16.msra.mxu0 %v2641
        %2658 = vmatprep.subr.bf16.mxu0 0
        %2659 = vmatpush1.bf16.msra.mxu0 %v2642
        %2660 = vmatprep.subr.bf16.mxu0 0
        %2661 = vmatpush1.bf16.msra.mxu0 %v2643
        %2662 = vmatprep.subr.bf16.mxu0 0
        %2663 = vmatpush1.bf16.msra.mxu0 %v2644
        %2664 = vmatprep.subr.bf16.mxu0 0
        %2665 = vmatpush1.bf16.msra.mxu0 %v2645
        %2666 = vmatprep.subr.bf16.mxu0 0
        %2667 = vmatpush1.bf16.msra.mxu0 0
        %2668 = vmatprep.subr.bf16.mxu0 0
        %2669 = vmatpush1.bf16.msra.mxu0 0
        %2670 = vmatprep.subr.bf16.mxu0 0
        %2671 = vmatpush1.bf16.msra.mxu0 0
        %2672 = vmatprep.subr.bf16.mxu0 0
        %2673 = vmatpush1.bf16.msra.mxu0 0
        %2674 = vmatprep.subr.bf16.mxu0 0
        %2675 = vmatpush1.bf16.msra.mxu0 0
        %2676 = vmatprep.subr.bf16.mxu0 0
        %2677 = vmatpush1.bf16.msra.mxu0 0
        %2678 = vmatprep.subr.bf16.mxu0 0
        %2679 = vmatpush1.bf16.msra.mxu0 0
        %2680 = vmatprep.subr.bf16.mxu0 0
        %2681 = vmatpush1.bf16.msra.mxu0 0
        %2682 = vmatprep.subr.bf16.mxu0 0
        %2683 = vmatpush1.bf16.msra.mxu0 0
        %2684 = vmatprep.subr.bf16.mxu0 0
        %2685 = vmatpush1.bf16.msra.mxu0 0
        %2686 = vmatprep.mubr.bf16.mxu0 0
        %2687 = vmatmul.mubr.bf16.gmra.mrb[0].mxu0 %v2213
        %v2688 = vpop.f32.mrb[0].mxu0
        %v2689 = vadd.f32 0.0, %v2688
        %v2690 = vpop.f32.mrb[0].mxu0
        %v2691 = vpop.f32.mrb[0].mxu0
        %v2692 = vadd.f32 0.0, %v2691
        %v2693 = vpop.f32.mrb[0].mxu0
        %2694 = vmatprep.mubr.bf16.mxu0 0
        %2695 = vmatmul.mubr.bf16.gmra.mrb[0].mxu0 %v2215
        %v2696 = vpop.f32.mrb[0].mxu0
        %v2697 = vadd.f32 0.0, %v2696
        %v2698 = vpop.f32.mrb[0].mxu0
        %v2699 = vpop.f32.mrb[0].mxu0
        %v2700 = vadd.f32 0.0, %v2699
        %v2701 = vpop.f32.mrb[0].mxu0
        %2702 = vmatprep.mubr.bf16.mxu0 0
        %2703 = vmatmul.mubr.bf16.gmra.mrb[0].mxu0 %v2217
        %v2704 = vpop.f32.mrb[0].mxu0
        %v2705 = vadd.f32 0.0, %v2704
        %v2706 = vpop.f32.mrb[0].mxu0
        %v2707 = vpop.f32.mrb[0].mxu0
        %v2708 = vadd.f32 0.0, %v2707
        %v2709 = vpop.f32.mrb[0].mxu0
        %2710 = vmatprep.mubr.bf16.mxu0 0
        %2711 = vmatmul.mubr.bf16.gmra.mrb[0].mxu0 %v2219
        %v2712 = vpop.f32.mrb[0].mxu0
        %v2713 = vadd.f32 0.0, %v2712
        %v2714 = vpop.f32.mrb[0].mxu0
        %v2715 = vpop.f32.mrb[0].mxu0
        %v2716 = vadd.f32 0.0, %v2715
        %v2717 = vpop.f32.mrb[0].mxu0
        %2718 = vmatprep.mubr.bf16.mxu0 0
        %2719 = vmatmul.mubr.bf16.gmra.mrb[0].mxu0 %v2221
        %v2720 = vpop.f32.mrb[0].mxu0
        %v2721 = vadd.f32 0.0, %v2720
        %v2722 = vpop.f32.mrb[0].mxu0
        %v2723 = vpop.f32.mrb[0].mxu0
        %v2724 = vadd.f32 0.0, %v2723
        %v2725 = vpop.f32.mrb[0].mxu0
        %2726 = vmatprep.mubr.bf16.mxu0 0
        %2727 = vmatmul.mubr.bf16.gmra.mrb[0].mxu0 %v2223
        %v2728 = vpop.f32.mrb[0].mxu0
        %v2729 = vadd.f32 0.0, %v2728
        %v2730 = vpop.f32.mrb[0].mxu0
        %v2731 = vpop.f32.mrb[0].mxu0
        %v2732 = vadd.f32 0.0, %v2731
        %v2733 = vpop.f32.mrb[0].mxu0
        %2734 = vmatprep.mubr.bf16.mxu0 0
        %2735 = vmatmul.mubr.bf16.gmra.mrb[0].mxu0 %v2225
        %v2736 = vpop.f32.mrb[0].mxu0
        %v2737 = vadd.f32 0.0, %v2736
        %v2738 = vpop.f32.mrb[0].mxu0
        %v2739 = vpop.f32.mrb[0].mxu0
        %v2740 = vadd.f32 0.0, %v2739
        %v2741 = vpop.f32.mrb[0].mxu0
        %2742 = vmatprep.mubr.bf16.mxu0 0
        %2743 = vmatmul.mubr.bf16.gmra.mrb[0].mxu0 %v2227
        %v2744 = vpop.f32.mrb[0].mxu0
        %v2745 = vadd.f32 0.0, %v2744
        %v2746 = vpop.f32.mrb[0].mxu0
        %v2747 = vpop.f32.mrb[0].mxu0
        %v2748 = vadd.f32 0.0, %v2747
        %v2749 = vpop.f32.mrb[0].mxu0
        %2750 = vmatprep.mubr.bf16.mxu0 0
        %2751 = vmatmul.mubr.bf16.gmra.mrb[0].mxu0 %v2229
        %v2752 = vpop.f32.mrb[0].mxu0
        %v2753 = vadd.f32 0.0, %v2752
        %v2754 = vpop.f32.mrb[0].mxu0
        %v2755 = vpop.f32.mrb[0].mxu0
        %v2756 = vadd.f32 0.0, %v2755
        %v2757 = vpop.f32.mrb[0].mxu0
        %2758 = vmatprep.mubr.bf16.mxu0 0
        %2759 = vmatmul.mubr.bf16.gmra.mrb[0].mxu0 %v2231
        %v2760 = vpop.f32.mrb[0].mxu0
        %v2761 = vadd.f32 0.0, %v2760
        %v2762 = vpop.f32.mrb[0].mxu0
        %v2763 = vpop.f32.mrb[0].mxu0
        %v2764 = vadd.f32 0.0, %v2763
        %v2765 = vpop.f32.mrb[0].mxu0
        %2766 = vmatprep.mubr.bf16.mxu0 0
        %2767 = vmatmul.mubr.bf16.gmra.mrb[0].mxu0 %v2233
        %v2768 = vpop.f32.mrb[0].mxu0
        %v2769 = vadd.f32 0.0, %v2768
        %v2770 = vpop.f32.mrb[0].mxu0
        %v2771 = vpop.f32.mrb[0].mxu0
        %v2772 = vadd.f32 0.0, %v2771
        %v2773 = vpop.f32.mrb[0].mxu0
        %2774 = vmatprep.mubr.bf16.mxu0 0
        %2775 = vmatmul.mubr.bf16.gmra.mrb[0].mxu0 %v2235
        %v2776 = vpop.f32.mrb[0].mxu0
        %v2777 = vadd.f32 0.0, %v2776
        %v2778 = vpop.f32.mrb[0].mxu0
        %v2779 = vpop.f32.mrb[0].mxu0
        %v2780 = vadd.f32 0.0, %v2779
        %v2781 = vpop.f32.mrb[0].mxu0
        %2782 = vmatprep.mubr.bf16.mxu0 0
        %2783 = vmatmul.mubr.bf16.gmra.mrb[0].mxu0 %v2237
        %v2784 = vpop.f32.mrb[0].mxu0
        %v2785 = vadd.f32 0.0, %v2784
        %v2786 = vpop.f32.mrb[0].mxu0
        %v2787 = vpop.f32.mrb[0].mxu0
        %v2788 = vadd.f32 0.0, %v2787
        %v2789 = vpop.f32.mrb[0].mxu0
        %2790 = vmatprep.mubr.bf16.mxu0 0
        %2791 = vmatmul.mubr.bf16.gmra.mrb[0].mxu0 %v2239
        %v2792 = vpop.f32.mrb[0].mxu0
        %v2793 = vadd.f32 0.0, %v2792
        %v2794 = vpop.f32.mrb[0].mxu0
        %v2795 = vpop.f32.mrb[0].mxu0
        %v2796 = vadd.f32 0.0, %v2795
        %v2797 = vpop.f32.mrb[0].mxu0
        %2798 = vmatprep.mubr.bf16.mxu0 0
        %2799 = vmatmul.mubr.bf16.gmra.mrb[0].mxu0 %v2241
        %v2800 = vpop.f32.mrb[0].mxu0
        %v2801 = vadd.f32 0.0, %v2800
        %v2802 = vpop.f32.mrb[0].mxu0
        %v2803 = vpop.f32.mrb[0].mxu0
        %v2804 = vadd.f32 0.0, %v2803
        %v2805 = vpop.f32.mrb[0].mxu0
        %2806 = vmatprep.mubr.bf16.mxu0 0
        %2807 = vmatmul.mubr.bf16.gmra.mrb[0].mxu0 %v2652
        %v2808 = vpop.f32.mrb[0].mxu0
        %v2809 = vadd.f32 0.0, %v2808
        %v2810 = vpop.f32.mrb[0].mxu0
        %v2811 = vpop.f32.mrb[0].mxu0
        %v2812 = vadd.f32 0.0, %v2811
        %v2813 = vpop.f32.mrb[0].mxu0
        %2814 = vdwg.mxu0
        %v2815 = vadd.f32 %v2477, %v2689
        %v2816 = vadd.f32 %v2480, %v2692
        %v2817 = vadd.f32 %v2485, %v2697
        %v2818 = vadd.f32 %v2488, %v2700
        %v2819 = vadd.f32 %v2493, %v2705
        %v2820 = vadd.f32 %v2496, %v2708
        %v2821 = vadd.f32 %v2501, %v2713
        %v2822 = vadd.f32 %v2504, %v2716
        %v2823 = vadd.f32 %v2509, %v2721
        %v2824 = vadd.f32 %v2512, %v2724
        %v2825 = vadd.f32 %v2517, %v2729
        %v2826 = vadd.f32 %v2520, %v2732
        %v2827 = vadd.f32 %v2525, %v2737
        %v2828 = vadd.f32 %v2528, %v2740
        %v2829 = vadd.f32 %v2533, %v2745
        %v2830 = vadd.f32 %v2536, %v2748
        %v2831 = vadd.f32 %v2541, %v2753
        %v2832 = vadd.f32 %v2544, %v2756
        %v2833 = vadd.f32 %v2549, %v2761
        %v2834 = vadd.f32 %v2552, %v2764
        %v2835 = vadd.f32 %v2557, %v2769
        %v2836 = vadd.f32 %v2560, %v2772
        %v2837 = vadd.f32 %v2565, %v2777
        %v2838 = vadd.f32 %v2568, %v2780
        %v2839 = vadd.f32 %v2573, %v2785
        %v2840 = vadd.f32 %v2576, %v2788
        %v2841 = vadd.f32 %v2581, %v2793
        %v2842 = vadd.f32 %v2584, %v2796
        %v2843 = vadd.f32 %v2589, %v2801
        %v2844 = vadd.f32 %v2592, %v2804
        %v2845 = vadd.f32 %v2597, %v2809
        %v2846 = vadd.f32 %v2600, %v2812
        %v2847 = vld [vmem:[#allocation11] sm:$0x1]
        %v2849 = vlaneseq
        %v2850 = vshrl.u32 %v2849, 7
        %v2851 = vsub.s32 0, %v2850
        %v2852 = vrot.slane %v2847, %v2851
        %v2854 = vadd.f32 %v2815, %v2852
        %v2855 = vadd.f32 %v2816, %v2852
        %v2856 = vadd.f32 %v2817, %v2852
        %v2857 = vadd.f32 %v2818, %v2852
        %v2858 = vadd.f32 %v2819, %v2852
        %v2859 = vadd.f32 %v2820, %v2852
        %v2860 = vadd.f32 %v2821, %v2852
        %v2861 = vadd.f32 %v2822, %v2852
        %v2862 = vadd.f32 %v2823, %v2852
        %v2863 = vadd.f32 %v2824, %v2852
        %v2864 = vadd.f32 %v2825, %v2852
        %v2865 = vadd.f32 %v2826, %v2852
        %v2866 = vadd.f32 %v2827, %v2852
        %v2867 = vadd.f32 %v2828, %v2852
        %v2868 = vadd.f32 %v2829, %v2852
        %v2869 = vadd.f32 %v2830, %v2852
        %v2870 = vadd.f32 %v2831, %v2852
        %v2871 = vadd.f32 %v2832, %v2852
        %v2872 = vadd.f32 %v2833, %v2852
        %v2873 = vadd.f32 %v2834, %v2852
        %v2874 = vadd.f32 %v2835, %v2852
        %v2875 = vadd.f32 %v2836, %v2852
        %v2876 = vadd.f32 %v2837, %v2852
        %v2877 = vadd.f32 %v2838, %v2852
        %v2878 = vadd.f32 %v2839, %v2852
        %v2879 = vadd.f32 %v2840, %v2852
        %v2880 = vadd.f32 %v2841, %v2852
        %v2881 = vadd.f32 %v2842, %v2852
        %v2882 = vadd.f32 %v2843, %v2852
        %v2883 = vadd.f32 %v2844, %v2852
        %v2884 = vadd.f32 %v2845, %v2852
        %v2885 = vadd.f32 %v2846, %v2852
        %v2886 = vxor.u32 %v2854, 2147483648
        %v2887 = vxor.u32 %v2855, 2147483648
        %v2888 = vxor.u32 %v2856, 2147483648
        %v2889 = vxor.u32 %v2857, 2147483648
        %v2890 = vxor.u32 %v2858, 2147483648
        %v2891 = vxor.u32 %v2859, 2147483648
        %v2892 = vxor.u32 %v2860, 2147483648
        %v2893 = vxor.u32 %v2861, 2147483648
        %v2894 = vxor.u32 %v2862, 2147483648
        %v2895 = vxor.u32 %v2863, 2147483648
        %v2896 = vxor.u32 %v2864, 2147483648
        %v2897 = vxor.u32 %v2865, 2147483648
        %v2898 = vxor.u32 %v2866, 2147483648
        %v2899 = vxor.u32 %v2867, 2147483648
        %v2900 = vxor.u32 %v2868, 2147483648
        %v2901 = vxor.u32 %v2869, 2147483648
        %v2902 = vxor.u32 %v2870, 2147483648
        %v2903 = vxor.u32 %v2871, 2147483648
        %v2904 = vxor.u32 %v2872, 2147483648
        %v2905 = vxor.u32 %v2873, 2147483648
        %v2906 = vxor.u32 %v2874, 2147483648
        %v2907 = vxor.u32 %v2875, 2147483648
        %v2908 = vxor.u32 %v2876, 2147483648
        %v2909 = vxor.u32 %v2877, 2147483648
        %v2910 = vxor.u32 %v2878, 2147483648
        %v2911 = vxor.u32 %v2879, 2147483648
        %v2912 = vxor.u32 %v2880, 2147483648
        %v2913 = vxor.u32 %v2881, 2147483648
        %v2914 = vxor.u32 %v2882, 2147483648
        %v2915 = vxor.u32 %v2883, 2147483648
        %v2916 = vxor.u32 %v2884, 2147483648
        %v2917 = vxor.u32 %v2885, 2147483648
        %v2918 = vmul.f32 %v2886, 1.442695
        %v2919 = vpow.pop %v2918
        %v2920 = vmul.f32 %v2887, 1.442695
        %v2921 = vpow.pop %v2920
        %v2922 = vmul.f32 %v2888, 1.442695
        %v2923 = vpow.pop %v2922
        %v2924 = vmul.f32 %v2889, 1.442695
        %v2925 = vpow.pop %v2924
        %v2926 = vmul.f32 %v2890, 1.442695
        %v2927 = vpow.pop %v2926
        %v2928 = vmul.f32 %v2891, 1.442695
        %v2929 = vpow.pop %v2928
        %v2930 = vmul.f32 %v2892, 1.442695
        %v2931 = vpow.pop %v2930
        %v2932 = vmul.f32 %v2893, 1.442695
        %v2933 = vpow.pop %v2932
        %v2934 = vmul.f32 %v2894, 1.442695
        %v2935 = vpow.pop %v2934
        %v2936 = vmul.f32 %v2895, 1.442695
        %v2937 = vpow.pop %v2936
        %v2938 = vmul.f32 %v2896, 1.442695
        %v2939 = vpow.pop %v2938
        %v2940 = vmul.f32 %v2897, 1.442695
        %v2941 = vpow.pop %v2940
        %v2942 = vmul.f32 %v2898, 1.442695
        %v2943 = vpow.pop %v2942
        %v2944 = vmul.f32 %v2899, 1.442695
        %v2945 = vpow.pop %v2944
        %v2946 = vmul.f32 %v2900, 1.442695
        %v2947 = vpow.pop %v2946
        %v2948 = vmul.f32 %v2901, 1.442695
        %v2949 = vpow.pop %v2948
        %v2950 = vmul.f32 %v2902, 1.442695
        %v2951 = vpow.pop %v2950
        %v2952 = vmul.f32 %v2903, 1.442695
        %v2953 = vpow.pop %v2952
        %v2954 = vmul.f32 %v2904, 1.442695
        %v2955 = vpow.pop %v2954
        %v2956 = vmul.f32 %v2905, 1.442695
        %v2957 = vpow.pop %v2956
        %v2958 = vmul.f32 %v2906, 1.442695
        %v2959 = vpow.pop %v2958
        %v2960 = vmul.f32 %v2907, 1.442695
        %v2961 = vpow.pop %v2960
        %v2962 = vmul.f32 %v2908, 1.442695
        %v2963 = vpow.pop %v2962
        %v2964 = vmul.f32 %v2909, 1.442695
        %v2965 = vpow.pop %v2964
        %v2966 = vmul.f32 %v2910, 1.442695
        %v2967 = vpow.pop %v2966
        %v2968 = vmul.f32 %v2911, 1.442695
        %v2969 = vpow.pop %v2968
        %v2970 = vmul.f32 %v2912, 1.442695
        %v2971 = vpow.pop %v2970
        %v2972 = vmul.f32 %v2913, 1.442695
        %v2973 = vpow.pop %v2972
        %v2974 = vmul.f32 %v2914, 1.442695
        %v2975 = vpow.pop %v2974
        %v2976 = vmul.f32 %v2915, 1.442695
        %v2977 = vpow.pop %v2976
        %v2978 = vmul.f32 %v2916, 1.442695
        %v2979 = vpow.pop %v2978
        %v2980 = vmul.f32 %v2917, 1.442695
        %v2981 = vpow.pop %v2980
        %v2982 = vadd.f32 %v2919, 1.0
        %v2983 = vadd.f32 %v2921, 1.0
        %v2984 = vadd.f32 %v2923, 1.0
        %v2985 = vadd.f32 %v2925, 1.0
        %v2986 = vadd.f32 %v2927, 1.0
        %v2987 = vadd.f32 %v2929, 1.0
        %v2988 = vadd.f32 %v2931, 1.0
        %v2989 = vadd.f32 %v2933, 1.0
        %v2990 = vadd.f32 %v2935, 1.0
        %v2991 = vadd.f32 %v2937, 1.0
        %v2992 = vadd.f32 %v2939, 1.0
        %v2993 = vadd.f32 %v2941, 1.0
        %v2994 = vadd.f32 %v2943, 1.0
        %v2995 = vadd.f32 %v2945, 1.0
        %v2996 = vadd.f32 %v2947, 1.0
        %v2997 = vadd.f32 %v2949, 1.0
        %v2998 = vadd.f32 %v2951, 1.0
        %v2999 = vadd.f32 %v2953, 1.0
        %v3000 = vadd.f32 %v2955, 1.0
        %v3001 = vadd.f32 %v2957, 1.0
        %v3002 = vadd.f32 %v2959, 1.0
        %v3003 = vadd.f32 %v2961, 1.0
        %v3004 = vadd.f32 %v2963, 1.0
        %v3005 = vadd.f32 %v2965, 1.0
        %v3006 = vadd.f32 %v2967, 1.0
        %v3007 = vadd.f32 %v2969, 1.0
        %v3008 = vadd.f32 %v2971, 1.0
        %v3009 = vadd.f32 %v2973, 1.0
        %v3010 = vadd.f32 %v2975, 1.0
        %v3011 = vadd.f32 %v2977, 1.0
        %v3012 = vadd.f32 %v2979, 1.0
        %v3013 = vadd.f32 %v2981, 1.0
        %v3014 = vrcp.pop %v2982
        %v3015 = vmul.f32 1.0, %v3014
        %v3016 = vrcp.pop %v2983
        %v3017 = vmul.f32 1.0, %v3016
        %v3018 = vrcp.pop %v2984
        %v3019 = vmul.f32 1.0, %v3018
        %v3020 = vrcp.pop %v2985
        %v3021 = vmul.f32 1.0, %v3020
        %v3022 = vrcp.pop %v2986
        %v3023 = vmul.f32 1.0, %v3022
        %v3024 = vrcp.pop %v2987
        %v3025 = vmul.f32 1.0, %v3024
        %v3026 = vrcp.pop %v2988
        %v3027 = vmul.f32 1.0, %v3026
        %v3028 = vrcp.pop %v2989
        %v3029 = vmul.f32 1.0, %v3028
        %v3030 = vrcp.pop %v2990
        %v3031 = vmul.f32 1.0, %v3030
        %v3032 = vrcp.pop %v2991
        %v3033 = vmul.f32 1.0, %v3032
        %v3034 = vrcp.pop %v2992
        %v3035 = vmul.f32 1.0, %v3034
        %v3036 = vrcp.pop %v2993
        %v3037 = vmul.f32 1.0, %v3036
        %v3038 = vrcp.pop %v2994
        %v3039 = vmul.f32 1.0, %v3038
        %v3040 = vrcp.pop %v2995
        %v3041 = vmul.f32 1.0, %v3040
        %v3042 = vrcp.pop %v2996
        %v3043 = vmul.f32 1.0, %v3042
        %v3044 = vrcp.pop %v2997
        %v3045 = vmul.f32 1.0, %v3044
        %v3046 = vrcp.pop %v2998
        %v3047 = vmul.f32 1.0, %v3046
        %v3048 = vrcp.pop %v2999
        %v3049 = vmul.f32 1.0, %v3048
        %v3050 = vrcp.pop %v3000
        %v3051 = vmul.f32 1.0, %v3050
        %v3052 = vrcp.pop %v3001
        %v3053 = vmul.f32 1.0, %v3052
        %v3054 = vrcp.pop %v3002
        %v3055 = vmul.f32 1.0, %v3054
        %v3056 = vrcp.pop %v3003
        %v3057 = vmul.f32 1.0, %v3056
        %v3058 = vrcp.pop %v3004
        %v3059 = vmul.f32 1.0, %v3058
        %v3060 = vrcp.pop %v3005
        %v3061 = vmul.f32 1.0, %v3060
        %v3062 = vrcp.pop %v3006
        %v3063 = vmul.f32 1.0, %v3062
        %v3064 = vrcp.pop %v3007
        %v3065 = vmul.f32 1.0, %v3064
        %v3066 = vrcp.pop %v3008
        %v3067 = vmul.f32 1.0, %v3066
        %v3068 = vrcp.pop %v3009
        %v3069 = vmul.f32 1.0, %v3068
        %v3070 = vrcp.pop %v3010
        %v3071 = vmul.f32 1.0, %v3070
        %v3072 = vrcp.pop %v3011
        %v3073 = vmul.f32 1.0, %v3072
        %v3074 = vrcp.pop %v3012
        %v3075 = vmul.f32 1.0, %v3074
        %v3076 = vrcp.pop %v3013
        %v3077 = vmul.f32 1.0, %v3076
        %v3078 = vmul.f32 %v2854, %v3015
        %v3079 = vmul.f32 %v2855, %v3017
        %v3080 = vmul.f32 %v2856, %v3019
        %v3081 = vmul.f32 %v2857, %v3021
        %v3082 = vmul.f32 %v2858, %v3023
        %v3083 = vmul.f32 %v2859, %v3025
        %v3084 = vmul.f32 %v2860, %v3027
        %v3085 = vmul.f32 %v2861, %v3029
        %v3086 = vmul.f32 %v2862, %v3031
        %v3087 = vmul.f32 %v2863, %v3033
        %v3088 = vmul.f32 %v2864, %v3035
        %v3089 = vmul.f32 %v2865, %v3037
        %v3090 = vmul.f32 %v2866, %v3039
        %v3091 = vmul.f32 %v2867, %v3041
        %v3092 = vmul.f32 %v2868, %v3043
        %v3093 = vmul.f32 %v2869, %v3045
        %v3094 = vmul.f32 %v2870, %v3047
        %v3095 = vmul.f32 %v2871, %v3049
        %v3096 = vmul.f32 %v2872, %v3051
        %v3097 = vmul.f32 %v2873, %v3053
        %v3098 = vmul.f32 %v2874, %v3055
        %v3099 = vmul.f32 %v2875, %v3057
        %v3100 = vmul.f32 %v2876, %v3059
        %v3101 = vmul.f32 %v2877, %v3061
        %v3102 = vmul.f32 %v2878, %v3063
        %v3103 = vmul.f32 %v2879, %v3065
        %v3104 = vmul.f32 %v2880, %v3067
        %v3105 = vmul.f32 %v2881, %v3069
        %v3106 = vmul.f32 %v2882, %v3071
        %v3107 = vmul.f32 %v2883, %v3073
        %v3108 = vmul.f32 %v2884, %v3075
        %v3109 = vmul.f32 %v2885, %v3077
        %v3110 = vld [vmem:[%s254] sm:$0xff]
        %v3111 = vld [vmem:[%s254 + $0x8] sm:$0xff]
        %v3112 = vld [vmem:[%s254 + $0x10] sm:$0xff]
        %v3113 = vld [vmem:[%s254 + $0x18] sm:$0xff]
        %v3114 = vld [vmem:[%s254 + $0x20] sm:$0xff]
        %v3115 = vld [vmem:[%s254 + $0x28] sm:$0xff]
        %v3116 = vld [vmem:[%s254 + $0x30] sm:$0xff]
        %v3117 = vld [vmem:[%s254 + $0x38] sm:$0xff]
        %v3118 = vld [vmem:[%s254 + $0x40] sm:$0xff]
        %v3119 = vld [vmem:[%s254 + $0x48] sm:$0xff]
        %v3120 = vld [vmem:[%s254 + $0x50] sm:$0xff]
        %v3121 = vld [vmem:[%s254 + $0x58] sm:$0xff]
        %v3122 = vld [vmem:[%s254 + $0x60] sm:$0xff]
        %v3123 = vld [vmem:[%s254 + $0x68] sm:$0xff]
        %v3124 = vld [vmem:[%s254 + $0x70] sm:$0xff]
        %v3125 = vld [vmem:[%s254 + $0x78] sm:$0xff]
        %v3126 = vld [vmem:[%s254 + $0x80] sm:$0xff]
        %v3127 = vld [vmem:[%s254 + $0x88] sm:$0xff]
        %v3128 = vld [vmem:[%s254 + $0x90] sm:$0xff]
        %v3129 = vld [vmem:[%s254 + $0x98] sm:$0xff]
        %v3130 = vld [vmem:[%s254 + $0xa0] sm:$0xff]
        %v3131 = vld [vmem:[%s254 + $0xa8] sm:$0xff]
        %v3132 = vld [vmem:[%s254 + $0xb0] sm:$0xff]
        %v3133 = vld [vmem:[%s254 + $0xb8] sm:$0xff]
        %v3134 = vld [vmem:[%s254 + $0xc0] sm:$0xff]
        %v3135 = vld [vmem:[%s254 + $0xc8] sm:$0xff]
        %v3136 = vld [vmem:[%s254 + $0xd0] sm:$0xff]
        %v3137 = vld [vmem:[%s254 + $0xd8] sm:$0xff]
        %v3138 = vld [vmem:[%s254 + $0xe0] sm:$0xff]
        %v3139 = vld [vmem:[%s254 + $0xe8] sm:$0xff]
        %v3140 = vld [vmem:[%s254 + $0xf0] sm:$0xff]
        %v3141 = vld [vmem:[%s254 + $0xf8] sm:$0xff]
        %v3142 = vadd.f32 %v3078, %v3110
        %v3143 = vadd.f32 %v3079, %v3111
        %v3144 = vadd.f32 %v3080, %v3112
        %v3145 = vadd.f32 %v3081, %v3113
        %v3146 = vadd.f32 %v3082, %v3114
        %v3147 = vadd.f32 %v3083, %v3115
        %v3148 = vadd.f32 %v3084, %v3116
        %v3149 = vadd.f32 %v3085, %v3117
        %v3150 = vadd.f32 %v3086, %v3118
        %v3151 = vadd.f32 %v3087, %v3119
        %v3152 = vadd.f32 %v3088, %v3120
        %v3153 = vadd.f32 %v3089, %v3121
        %v3154 = vadd.f32 %v3090, %v3122
        %v3155 = vadd.f32 %v3091, %v3123
        %v3156 = vadd.f32 %v3092, %v3124
        %v3157 = vadd.f32 %v3093, %v3125
        %v3158 = vadd.f32 %v3094, %v3126
        %v3159 = vadd.f32 %v3095, %v3127
        %v3160 = vadd.f32 %v3096, %v3128
        %v3161 = vadd.f32 %v3097, %v3129
        %v3162 = vadd.f32 %v3098, %v3130
        %v3163 = vadd.f32 %v3099, %v3131
        %v3164 = vadd.f32 %v3100, %v3132
        %v3165 = vadd.f32 %v3101, %v3133
        %v3166 = vadd.f32 %v3102, %v3134
        %v3167 = vadd.f32 %v3103, %v3135
        %v3168 = vadd.f32 %v3104, %v3136
        %v3169 = vadd.f32 %v3105, %v3137
        %v3170 = vadd.f32 %v3106, %v3138
        %v3171 = vadd.f32 %v3107, %v3139
        %v3172 = vadd.f32 %v3108, %v3140
        %v3173 = vadd.f32 %v3109, %v3141
        %3174 = vst.msk [vmem:[%s296] sm:$0xff] %vm385, %v3142
        %3175 = vst.msk [vmem:[%s296 + $0x8] sm:$0xff] %vm385, %v3143
        %3176 = vst.msk [vmem:[%s296 + $0x10] sm:$0xff] %vm385, %v3144
        %3177 = vst.msk [vmem:[%s296 + $0x18] sm:$0xff] %vm385, %v3145
        %3178 = vst.msk [vmem:[%s296 + $0x20] sm:$0xff] %vm385, %v3146
        %3179 = vst.msk [vmem:[%s296 + $0x28] sm:$0xff] %vm385, %v3147
        %3180 = vst.msk [vmem:[%s296 + $0x30] sm:$0xff] %vm385, %v3148
        %3181 = vst.msk [vmem:[%s296 + $0x38] sm:$0xff] %vm385, %v3149
        %3182 = vst.msk [vmem:[%s296 + $0x40] sm:$0xff] %vm385, %v3150
        %3183 = vst.msk [vmem:[%s296 + $0x48] sm:$0xff] %vm385, %v3151
        %3184 = vst.msk [vmem:[%s296 + $0x50] sm:$0xff] %vm385, %v3152
        %3185 = vst.msk [vmem:[%s296 + $0x58] sm:$0xff] %vm385, %v3153
        %3186 = vst.msk [vmem:[%s296 + $0x60] sm:$0xff] %vm385, %v3154
        %3187 = vst.msk [vmem:[%s296 + $0x68] sm:$0xff] %vm385, %v3155
        %3188 = vst.msk [vmem:[%s296 + $0x70] sm:$0xff] %vm385, %v3156
        %3189 = vst.msk [vmem:[%s296 + $0x78] sm:$0xff] %vm385, %v3157
        %3190 = vst.msk [vmem:[%s296 + $0x80] sm:$0xff] %vm385, %v3158
        %3191 = vst.msk [vmem:[%s296 + $0x88] sm:$0xff] %vm385, %v3159
        %3192 = vst.msk [vmem:[%s296 + $0x90] sm:$0xff] %vm385, %v3160
        %3193 = vst.msk [vmem:[%s296 + $0x98] sm:$0xff] %vm385, %v3161
        %3194 = vst.msk [vmem:[%s296 + $0xa0] sm:$0xff] %vm385, %v3162
        %3195 = vst.msk [vmem:[%s296 + $0xa8] sm:$0xff] %vm385, %v3163
        %3196 = vst.msk [vmem:[%s296 + $0xb0] sm:$0xff] %vm385, %v3164
        %3197 = vst.msk [vmem:[%s296 + $0xb8] sm:$0xff] %vm385, %v3165
        %3198 = vst.msk [vmem:[%s296 + $0xc0] sm:$0xff] %vm385, %v3166
        %3199 = vst.msk [vmem:[%s296 + $0xc8] sm:$0xff] %vm385, %v3167
        %3200 = vst.msk [vmem:[%s296 + $0xd0] sm:$0xff] %vm385, %v3168
        %3201 = vst.msk [vmem:[%s296 + $0xd8] sm:$0xff] %vm385, %v3169
        %3202 = vst.msk [vmem:[%s296 + $0xe0] sm:$0xff] %vm385, %v3170
        %3203 = vst.msk [vmem:[%s296 + $0xe8] sm:$0xff] %vm385, %v3171
        %3204 = vst.msk [vmem:[%s296 + $0xf0] sm:$0xff] %vm385, %v3172
        %3205 = vst.msk [vmem:[%s296 + $0xf8] sm:$0xff] %vm385, %v3173
        %s3206 = sand.u32 %s142, 1
        %s3207 = scalar_lea.sflag [#allocation5], %s3206
        %s3208 = sand.u32 %s142, 1
        %s3209 = smul.addr %s3208, 256
        %s3210 = scalar_lea.vmem [#allocation12], %s3209
        // Predicated region
        $region61: #{tpu_custom_call.1} parent=39 // pred_check
          %p3211 = pneg %p152
        $region62: #{tpu_custom_call.1} parent=39 // pred_check_branch
          %3213 = sbr.rel (%p3211) target = $region64
        $region63: #{tpu_custom_call.1} parent=39 // pred_region
          %s3215 = ssub.s32 4096, 4096
          %3216 = vsyncadd %s3207, %s3215
          %s3217 = smul.addr %s24, 32
          %s3218 = smul.addr %s3217, 128
          %s3219 = scalar_lea.hbm %s5, %s3218
          %s3220 = sshll.u32 %s3210, 4
          %s3221 = int_to_ptr.vmem [resolvable:$true] %s3220
          %3226 = dma.vmem_to_hbm [thread:$0]  %s3221, 4096, %s3219, %s3207, 128, 128, 8
        $region64: #{tpu_custom_call.1} parent=39 // pred_fallthru
          _
      $region40: #{tpu_custom_call.1} parent=5 // pred_fallthru
        _
      %p3227 = scmp.le.s32.totalorder 2, %s19
      // Predicated region
      $region65: #{tpu_custom_call.1} parent=5 // pred_check
        %p3228 = pneg %p3227
      $region66: #{tpu_custom_call.1} parent=5 // pred_check_branch
        %3230 = sbr.rel (%p3228) target = $region68
      $region67: #{tpu_custom_call.1} parent=5 // pred_region
        %s3231 = ssub.s32 %s19, 2
        // Predicated region
        $region69: #{tpu_custom_call.1} parent=67 // pred_check
          %p3232 = pneg %p158
        $region70: #{tpu_custom_call.1} parent=67 // pred_check_branch
          %3234 = sbr.rel (%p3232) target = $region72
        $region71: #{tpu_custom_call.1} parent=67 // pred_region
          %s3235 = sand.u32 %s143, 1
          %s3236 = scalar_lea.sflag [#allocation5], %s3235
          %s3237 = sand.u32 %s143, 1
          %s3238 = smul.addr %s3237, 256
          %s3239 = scalar_lea.vmem [#allocation12], %s3238
          %3240 = dma.done %s3236, 4096
        $region72: #{tpu_custom_call.1} parent=67 // pred_fallthru
          _
      $region68: #{tpu_custom_call.1} parent=5 // pred_fallthru
        _
    $region6: #{tpu_custom_call.1} parent=1 // loop_footer
      %s23 = sadd.s32 1, %s19
    $region7: #{tpu_custom_call.1} parent=1 // loop_footer_branch
      %18 = sbr.rel target = $region3
    $region8: #{tpu_custom_call.1} parent=1 // loop_exit
      _
    %3241 = vsyncpa [#allocation4], 1
    %s3242 = scalar_lea.sflag [#allocation4], 1
    %3243 = vsyncpa %s3242, 1
    %3244 = vsyncpa [#allocation7], 1
    %3245 = vsyncpa [#allocation10], 1
    %3246 = vsyncpa [#allocation5], 1
    %s3247 = scalar_lea.sflag [#allocation5], 1
    %3248 = vsyncpa %s3247, 1

</llo_original>
